<compile_context>
chip_gen: v7x
topology: tpu7x:2x2x1
jax: 0.10.0
libtpu: 0.0.40
codegen_flags: <defaults>
</compile_context>

<pallas_src>
import functools

import jax
import jax.numpy as jnp
from jax.experimental import pallas as pl
from jax.experimental.pallas import tpu as pltpu

BN_EPS = 1e-5
VMEM_LIMIT_BYTES = 48 * 1024 * 1024  # explicit scoped-VMEM budget (headroom on v7x)


# ----------------------------------------------------------------------------
# Kernels
# ----------------------------------------------------------------------------
def _linear_relu_kernel(x_ref, w_ref, b_ref, o_ref):
    """dnn1: o = relu(x @ W1 + b1) for one node-row tile."""
    h = jnp.dot(x_ref[...], w_ref[...], preferred_element_type=jnp.float32)
    o_ref[...] = jnp.maximum(h + b_ref[...], 0.0)


def _bn_stats_kernel(h_ref, sum_ref, sq_ref, *, n_real, tile_n):
    """Accumulate masked per-column sum and sum-of-squares across row tiles."""
    i = pl.program_id(0)

    @pl.when(i == 0)
    def _():
        sum_ref[...] = jnp.zeros_like(sum_ref)
        sq_ref[...] = jnp.zeros_like(sq_ref)

    h = h_ref[...]
    row = i * tile_n + jax.lax.broadcasted_iota(jnp.int32, h.shape, 0)
    hm = jnp.where(row < n_real, h, 0.0)          # exclude padded node rows
    sum_ref[...] += jnp.sum(hm, axis=0, keepdims=True)
    sq_ref[...] += jnp.sum(hm * hm, axis=0, keepdims=True)


def _bn_scale_shift(sum_ref, sq_ref, g_ref, be_ref, n_real):
    """Fold BN (batch stats, biased var) into a single per-column scale/shift."""
    inv_n = jnp.float32(1.0 / n_real)
    mean = sum_ref[...] * inv_n
    var = jnp.maximum(sq_ref[...] * inv_n - mean * mean, 0.0)
    scale = g_ref[...] * jax.lax.rsqrt(var + BN_EPS)
    shift = be_ref[...] - mean * scale
    return scale, shift


def _bn_matmul_kernel(h_ref, sum_ref, sq_ref, g_ref, be_ref, w_ref, o_ref, *, n_real):
    """hw = BN(h) @ W  (bf16 MXU matmul, f32 accumulation, bf16 output)."""
    scale, shift = _bn_scale_shift(sum_ref, sq_ref, g_ref, be_ref, n_real)
    h = h_ref[...] * scale + shift
    o_ref[...] = jnp.dot(h.astype(jnp.bfloat16), w_ref[...].astype(jnp.bfloat16),
                         preferred_element_type=jnp.float32).astype(o_ref.dtype)


def _matmul_kernel(h_ref, w_ref, o_ref):
    """hw = h @ W  (bf16 MXU matmul, f32 accumulation, bf16 output)."""
    o_ref[...] = jnp.dot(h_ref[...].astype(jnp.bfloat16),
                         w_ref[...].astype(jnp.bfloat16),
                         preferred_element_type=jnp.float32).astype(o_ref.dtype)


def _propagate_kernel(adj_ref, hw_ref, b_ref, o_ref, acc_ref):
    """h_out[row_tile] += A_hat[row_tile, k_tile] @ hw[k_tile]; +bias at last k."""
    k = pl.program_id(1)

    @pl.when(k == 0)
    def _():
        acc_ref[...] = jnp.zeros_like(acc_ref)

    acc_ref[...] += jnp.dot(adj_ref[...], hw_ref[...],
                            preferred_element_type=jnp.float32)

    @pl.when(k == pl.num_programs(1) - 1)
    def _():
        o_ref[...] = acc_ref[...] + b_ref[...]


def _bn_linear_kernel(h_ref, sum_ref, sq_ref, g_ref, be_ref, w_ref, b_ref, o_ref,
                      *, n_real, sigmoid):
    """dnn2: o = BN2(h) @ W2 + b2 (+ optional sigmoid), lane-dense output slab."""
    scale, shift = _bn_scale_shift(sum_ref, sq_ref, g_ref, be_ref, n_real)
    h = h_ref[...] * scale + shift
    out = jnp.dot(h, w_ref[...], preferred_element_type=jnp.float32) + b_ref[...]
    if sigmoid:
        out = jax.nn.sigmoid(out)
    o_ref[...] = out


# ----------------------------------------------------------------------------
# Glue / wrapper
# ----------------------------------------------------------------------------
def _round_up(x, m):
    return (x + m - 1) // m * m


def _node_tiling(n):
    """Return (n_pad, tile_n, tile_k) for the node axis."""
    if n >= 512:
        n_pad = _round_up(n, 512)
        return n_pad, 256, 512         # 256-aligned M (v6e/v7x MXU), >=512 streamed K
    n_pad = _round_up(n, 8)
    return n_pad, n_pad, n_pad         # small graph: single tile


def _cp(dims):
    return pltpu.CompilerParams(dimension_semantics=dims,
                                vmem_limit_bytes=VMEM_LIMIT_BYTES)


def gcn_normalized_adjacency(edge_index, num_nodes, *, n_pad=None,
                             dtype=jnp.bfloat16):
    """Dense A_hat matching PyG GCNConv gcn_norm (add_self_loops=True).

    Built once per (static) graph and cached by the caller; returned already
    zero-padded to (n_pad, n_pad) and cast to bf16 for the streaming matmul.
    """
    if n_pad is None:
        n_pad = _node_tiling(num_nodes)[0]
    src, dst = edge_index[0], edge_index[1]
    loops = jnp.arange(num_nodes, dtype=edge_index.dtype)
    src = jnp.concatenate([src, loops])
    dst = jnp.concatenate([dst, loops])
    ones = jnp.ones(src.shape[0], jnp.float32)
    deg = jnp.zeros((num_nodes,), jnp.float32).at[dst].add(ones)
    dinv = jnp.where(deg > 0, jax.lax.rsqrt(deg), 0.0)
    norm = dinv[src] * dinv[dst]
    # out[dst] += norm * x[src]  ==>  A_hat[dst, src] = norm
    adj = jnp.zeros((n_pad, n_pad), jnp.float32).at[dst, src].add(norm)
    return adj.astype(dtype)


def gnn_forward(x, adj, params, *, num_layers, sigmoid=False):
    n, f = x.shape
    hidden = params["w1"].shape[1]
    out_dim = params["w2"].shape[1]

    n_pad, tile_n, tile_k = _node_tiling(n)
    f_pad = _round_up(f, 128)
    h_pad = _round_up(hidden, 128)
    o_pad = _round_up(out_dim, 128)
    assert adj.shape == (n_pad, n_pad), "adj must be built with gcn_normalized_adjacency"

    nr = n_pad // tile_n   # node-row tiles ("parallel")
    nk = n_pad // tile_k   # streamed adjacency column tiles ("arbitrary")

    # ---- zero-pad operands: lane-dense features, tileable node axis ----
    ph = h_pad - hidden
    xp = jnp.pad(x.astype(jnp.float32), ((0, n_pad - n), (0, f_pad - f)))
    w1 = jnp.pad(params["w1"], ((0, f_pad - f), (0, ph)))
    b1 = jnp.pad(params["b1"], ((0, 0), (0, ph)))
    g1 = jnp.pad(params["bn1_g"], ((0, 0), (0, ph)))
    be1 = jnp.pad(params["bn1_b"], ((0, 0), (0, ph)))
    wg = jnp.pad(params["wg"], ((0, 0), (0, ph), (0, ph)))
    bg = jnp.pad(params["bg"], ((0, 0), (0, 0), (0, ph)))
    g2 = jnp.pad(params["bn2_g"], ((0, 0), (0, ph)))
    be2 = jnp.pad(params["bn2_b"], ((0, 0), (0, ph)))
    w2 = jnp.pad(params["w2"], ((0, ph), (0, o_pad - out_dim)))
    b2 = jnp.pad(params["b2"], ((0, 0), (0, o_pad - out_dim)))
    adj = adj.astype(jnp.bfloat16)

    def row_spec(width):
        return pl.BlockSpec((tile_n, width), lambda i: (i, 0))

    def rep_spec(shape):
        return pl.BlockSpec(shape, lambda i: tuple(0 for _ in shape))

    # ---- dnn1: h = relu(x @ W1 + b1) ----
    h = pl.pallas_call(
        _linear_relu_kernel,
        out_shape=jax.ShapeDtypeStruct((n_pad, h_pad), jnp.float32),
        grid=(nr,),
        in_specs=[row_spec(f_pad), rep_spec((f_pad, h_pad)), rep_spec((1, h_pad))],
        out_specs=row_spec(h_pad),
        compiler_params=_cp(("parallel",)),
    )(xp, w1, b1)

    # ---- BN statistics (single fused pass: sum & sum-of-squares) ----
    def bn_stats(hh):
        return pl.pallas_call(
            functools.partial(_bn_stats_kernel, n_real=n, tile_n=tile_n),
            out_shape=(jax.ShapeDtypeStruct((1, h_pad), jnp.float32),
                       jax.ShapeDtypeStruct((1, h_pad), jnp.float32)),
            grid=(nr,),
            in_specs=[row_spec(h_pad)],
            out_specs=(rep_spec((1, h_pad)), rep_spec((1, h_pad))),
            compiler_params=_cp(("arbitrary",)),
        )(hh)

    s1, q1 = bn_stats(h)

    # ---- GCNConv layers: h <- A_hat @ (f(h) @ W_l) + b_l ----
    for l in range(num_layers):
        if l == 0:
            # BN1 fused into the first feature transform.
            hw = pl.pallas_call(
                functools.partial(_bn_matmul_kernel, n_real=n),
                out_shape=jax.ShapeDtypeStruct((n_pad, h_pad), jnp.bfloat16),
                grid=(nr,),
                in_specs=[row_spec(h_pad), rep_spec((1, h_pad)), rep_spec((1, h_pad)),
                          rep_spec((1, h_pad)), rep_spec((1, h_pad)),
                          rep_spec((h_pad, h_pad))],
                out_specs=row_spec(h_pad),
                compiler_params=_cp(("parallel",)),
            )(h, s1, q1, g1, be1, wg[l])
        else:
            hw = pl.pallas_call(
                _matmul_kernel,
                out_shape=jax.ShapeDtypeStruct((n_pad, h_pad), jnp.bfloat16),
                grid=(nr,),
                in_specs=[row_spec(h_pad), rep_spec((h_pad, h_pad))],
                out_specs=row_spec(h_pad),
                compiler_params=_cp(("parallel",)),
            )(h, wg[l])

        # Dominant kernel: stream bf16 A_hat tiles, accumulate in f32 scratch.
        h = pl.pallas_call(
            _propagate_kernel,
            out_shape=jax.ShapeDtypeStruct((n_pad, h_pad), jnp.float32),
            grid=(nr, nk),
            in_specs=[pl.BlockSpec((tile_n, tile_k), lambda i, k: (i, k)),
                      pl.BlockSpec((tile_k, h_pad), lambda i, k: (k, 0)),
                      pl.BlockSpec((1, h_pad), lambda i, k: (0, 0))],
            out_specs=pl.BlockSpec((tile_n, h_pad), lambda i, k: (i, 0)),
            scratch_shapes=[pltpu.VMEM((tile_n, h_pad), jnp.float32)],
            compiler_params=_cp(("parallel", "arbitrary")),
        )(adj, hw, bg[l])

    # ---- BN2 + dnn2 (+ optional sigmoid), lane-dense output slab ----
    s2, q2 = bn_stats(h)
    out = pl.pallas_call(
        functools.partial(_bn_linear_kernel, n_real=n, sigmoid=sigmoid),
        out_shape=jax.ShapeDtypeStruct((n_pad, o_pad), jnp.float32),
        grid=(nr,),
        in_specs=[row_spec(h_pad), rep_spec((1, h_pad)), rep_spec((1, h_pad)),
                  rep_spec((1, h_pad)), rep_spec((1, h_pad)),
                  rep_spec((h_pad, o_pad)), rep_spec((1, o_pad))],
        out_specs=row_spec(o_pad),
        compiler_params=_cp(("parallel",)),
    )(h, s2, q2, g2, be2, w2, b2)

    return out[:n, :out_dim]


def init_params(key, input_dim, hidden_dim, output_dim, num_layers):
    ks = jax.random.split(key, 8)
    return {
        "w1": jax.random.normal(ks[0], (input_dim, hidden_dim), jnp.float32) * 0.1,
        "b1": jax.random.normal(ks[1], (1, hidden_dim), jnp.float32) * 0.01,
        "bn1_g": jnp.ones((1, hidden_dim), jnp.float32),
        "bn1_b": jnp.zeros((1, hidden_dim), jnp.float32),
        "wg": jax.random.normal(ks[2], (num_layers, hidden_dim, hidden_dim),
                                jnp.float32) * 0.1,
        "bg": jax.random.normal(ks[3], (num_layers, 1, hidden_dim),
                                jnp.float32) * 0.01,
        "bn2_g": jnp.ones((1, hidden_dim), jnp.float32),
        "bn2_b": jnp.zeros((1, hidden_dim), jnp.float32),
        "w2": jax.random.normal(ks[4], (hidden_dim, output_dim), jnp.float32) * 0.1,
        "b2": jax.random.normal(ks[5], (1, output_dim), jnp.float32) * 0.01,
    }


if __name__ == "__main__":
    key = jax.random.PRNGKey(0)
    N, INPUT_DIM, HIDDEN, OUTPUT_DIM, NUM_LAYERS = 16, 8, 32, 4, 2

    kx, ke, kp = jax.random.split(key, 3)
    x = jax.random.normal(kx, (N, INPUT_DIM), jnp.float32)
    E = 40
    edge_index = jax.random.randint(ke, (2, E), 0, N, dtype=jnp.int32)
    params = init_params(kp, INPUT_DIM, HIDDEN, OUTPUT_DIM, NUM_LAYERS)

    # Build the normalized adjacency ONCE (hoisted out of the forward path;
    # cache this across calls for static graphs).
    adj = gcn_normalized_adjacency(edge_index, N)

    fwd = jax.jit(functools.partial(gnn_forward, num_layers=NUM_LAYERS,
                                    sigmoid=False))
    out = fwd(x, adj, params)
    jax.block_until_ready(out)
    assert out.shape == (N, OUTPUT_DIM)
    print("KERNEL_OK")
</pallas_src>

<mosaic_0001>
module attributes {stable_mosaic.version = 11 : i64} {
  func.func @_bn_stats_kernel(%arg0: i32, %arg1: memref<16x128xf32, #tpu.memory_space<vmem>>, %arg2: memref<1x128xf32, #tpu.memory_space<vmem>>, %arg3: memref<1x128xf32, #tpu.memory_space<vmem>>) attributes {dimension_semantics = [#tpu.dimension_semantics<arbitrary>], iteration_bounds = array<i64: 1>, scalar_prefetch = 0 : i64, scratch_operands = 0 : i64, tpu.core_type = #tpu.core_type<tc>, window_params = [{transform_indices = @transform_0, window_bounds = array<i64: 16, 128>}, {pipeline_mode = #tpu.pipeline_mode<synchronous>, transform_indices = @transform_1, window_bounds = array<i64: 1, 128>}, {pipeline_mode = #tpu.pipeline_mode<synchronous>, transform_indices = @transform_2, window_bounds = array<i64: 1, 128>}]} {
    %c0_i32 = arith.constant 0 : i32
    %0 = arith.cmpi eq, %arg0, %c0_i32 : i32
    %1 = arith.extui %0 : i1 to i32
    %c0_i32_0 = arith.constant 0 : i32
    %2 = arith.cmpi ne, %1, %c0_i32_0 : i32
    scf.if %2 {
      %cst_13 = arith.constant 0.000000e+00 : f32
      %23 = vector.broadcast %cst_13 : f32 to vector<1x128xf32>
      %c0_14 = arith.constant 0 : index
      %c0_15 = arith.constant 0 : index
      %24 = vector.load %arg2[%c0_14, %c0_15] : memref<1x128xf32, #tpu.memory_space<vmem>>, vector<1x128xf32>
      tpu.vector_store %arg2[%c0_14, %c0_15], %23 {strides = array<i32>} : memref<1x128xf32, #tpu.memory_space<vmem>>, vector<1x128xf32>,
      %cst_16 = arith.constant 0.000000e+00 : f32
      %25 = vector.broadcast %cst_16 : f32 to vector<1x128xf32>
      %c0_17 = arith.constant 0 : index
      %c0_18 = arith.constant 0 : index
      %26 = vector.load %arg3[%c0_17, %c0_18] : memref<1x128xf32, #tpu.memory_space<vmem>>, vector<1x128xf32>
      tpu.vector_store %arg3[%c0_17, %c0_18], %25 {strides = array<i32>} : memref<1x128xf32, #tpu.memory_space<vmem>>, vector<1x128xf32>,
    } else {
    }
    %c0 = arith.constant 0 : index
    %c0_1 = arith.constant 0 : index
    %3 = vector.load %arg1[%c0, %c0_1] : memref<16x128xf32, #tpu.memory_space<vmem>>, vector<16x128xf32>
    %c16_i32 = arith.constant 16 : i32
    %4 = arith.muli %arg0, %c16_i32 : i32
    %5 = tpu.iota {dimensions = array<i32: 0>} : vector<16x128xi32>
    %6 = vector.broadcast %4 : i32 to vector<16x128xi32>
    %7 = arith.addi %6, %5 : vector<16x128xi32>
    %c16_i32_2 = arith.constant 16 : i32
    %8 = vector.broadcast %c16_i32_2 : i32 to vector<16x128xi32>
    %9 = arith.cmpi slt, %7, %8 : vector<16x128xi32>
    %cst = arith.constant 0.000000e+00 : f32
    %10 = vector.broadcast %cst : f32 to vector<16x128xf32>
    %11 = arith.select %9, %3, %10 : vector<16x128xi1>, vector<16x128xf32>
    %c0_3 = arith.constant 0 : index
    %c0_4 = arith.constant 0 : index
    %12 = vector.load %arg2[%c0_3, %c0_4] : memref<1x128xf32, #tpu.memory_space<vmem>>, vector<1x128xf32>
    %cst_5 = arith.constant dense<0.000000e+00> : vector<128xf32>
    %13 = vector.multi_reduction <add>, %11, %cst_5 [0] : vector<16x128xf32> to vector<128xf32>
    %14 = vector.shape_cast %13 : vector<128xf32> to vector<1x128xf32>
    %15 = arith.addf %12, %14 : vector<1x128xf32>
    %c0_6 = arith.constant 0 : index
    %c0_7 = arith.constant 0 : index
    %16 = vector.load %arg2[%c0_6, %c0_7] : memref<1x128xf32, #tpu.memory_space<vmem>>, vector<1x128xf32>
    tpu.vector_store %arg2[%c0_6, %c0_7], %15 {strides = array<i32>} : memref<1x128xf32, #tpu.memory_space<vmem>>, vector<1x128xf32>,
    %c0_8 = arith.constant 0 : index
    %c0_9 = arith.constant 0 : index
    %17 = vector.load %arg3[%c0_8, %c0_9] : memref<1x128xf32, #tpu.memory_space<vmem>>, vector<1x128xf32>
    %18 = arith.mulf %11, %11 : vector<16x128xf32>
    %cst_10 = arith.constant dense<0.000000e+00> : vector<128xf32>
    %19 = vector.multi_reduction <add>, %18, %cst_10 [0] : vector<16x128xf32> to vector<128xf32>
    %20 = vector.shape_cast %19 : vector<128xf32> to vector<1x128xf32>
    %21 = arith.addf %17, %20 : vector<1x128xf32>
    %c0_11 = arith.constant 0 : index
    %c0_12 = arith.constant 0 : index
    %22 = vector.load %arg3[%c0_11, %c0_12] : memref<1x128xf32, #tpu.memory_space<vmem>>, vector<1x128xf32>
    tpu.vector_store %arg3[%c0_11, %c0_12], %21 {strides = array<i32>} : memref<1x128xf32, #tpu.memory_space<vmem>>, vector<1x128xf32>,
    return
  }
  func.func @transform_0(%arg0: i32) -> (i32, i32) {
    %c0_i32 = arith.constant 0 : i32
    %c0_i32_0 = arith.constant 0 : i32
    return %arg0, %c0_i32 : i32, i32
  }
  func.func @transform_1(%arg0: i32) -> (i32, i32) {
    %c0_i32 = arith.constant 0 : i32
    %c0_i32_0 = arith.constant 0 : i32
    %c0_i32_1 = arith.constant 0 : i32
    return %c0_i32, %c0_i32_0 : i32, i32
  }
  func.func @transform_2(%arg0: i32) -> (i32, i32) {
    %c0_i32 = arith.constant 0 : i32
    %c0_i32_0 = arith.constant 0 : i32
    %c0_i32_1 = arith.constant 0 : i32
    return %c0_i32, %c0_i32_0 : i32, i32
  }
}

module attributes {stable_mosaic.version = 11 : i64} {
  func.func @_bn_matmul_kernel(%arg0: i32, %arg1: memref<16x128xf32, #tpu.memory_space<vmem>>, %arg2: memref<1x128xf32, #tpu.memory_space<vmem>>, %arg3: memref<1x128xf32, #tpu.memory_space<vmem>>, %arg4: memref<1x128xf32, #tpu.memory_space<vmem>>, %arg5: memref<1x128xf32, #tpu.memory_space<vmem>>, %arg6: memref<128x128xf32, #tpu.memory_space<vmem>>, %arg7: memref<16x128xbf16, #tpu.memory_space<vmem>>) attributes {dimension_semantics = [#tpu.dimension_semantics<parallel>], iteration_bounds = array<i64: 1>, scalar_prefetch = 0 : i64, scratch_operands = 0 : i64, tpu.core_type = #tpu.core_type<tc>, window_params = [{transform_indices = @transform_0, window_bounds = array<i64: 16, 128>}, {pipeline_mode = #tpu.pipeline_mode<synchronous>, transform_indices = @transform_1, window_bounds = array<i64: 1, 128>}, {pipeline_mode = #tpu.pipeline_mode<synchronous>, transform_indices = @transform_2, window_bounds = array<i64: 1, 128>}, {pipeline_mode = #tpu.pipeline_mode<synchronous>, transform_indices = @transform_3, window_bounds = array<i64: 1, 128>}, {pipeline_mode = #tpu.pipeline_mode<synchronous>, transform_indices = @transform_4, window_bounds = array<i64: 1, 128>}, {pipeline_mode = #tpu.pipeline_mode<synchronous>, transform_indices = @transform_5, window_bounds = array<i64: 128, 128>}, {transform_indices = @transform_6, window_bounds = array<i64: 16, 128>}]} {
    %c0 = arith.constant 0 : index
    %c0_0 = arith.constant 0 : index
    %0 = vector.load %arg2[%c0, %c0_0] : memref<1x128xf32, #tpu.memory_space<vmem>>, vector<1x128xf32>
    %cst = arith.constant 6.250000e-02 : f32
    %1 = vector.broadcast %cst : f32 to vector<1x128xf32>
    %2 = arith.mulf %0, %1 : vector<1x128xf32>
    %c0_1 = arith.constant 0 : index
    %c0_2 = arith.constant 0 : index
    %3 = vector.load %arg3[%c0_1, %c0_2] : memref<1x128xf32, #tpu.memory_space<vmem>>, vector<1x128xf32>
    %cst_3 = arith.constant 6.250000e-02 : f32
    %4 = vector.broadcast %cst_3 : f32 to vector<1x128xf32>
    %5 = arith.mulf %3, %4 : vector<1x128xf32>
    %6 = arith.mulf %2, %2 : vector<1x128xf32>
    %7 = arith.subf %5, %6 : vector<1x128xf32>
    %cst_4 = arith.constant 0.000000e+00 : f32
    %8 = vector.broadcast %cst_4 : f32 to vector<1x128xf32>
    %9 = arith.maximumf %7, %8 : vector<1x128xf32>
    %c0_5 = arith.constant 0 : index
    %c0_6 = arith.constant 0 : index
    %10 = vector.load %arg4[%c0_5, %c0_6] : memref<1x128xf32, #tpu.memory_space<vmem>>, vector<1x128xf32>
    %cst_7 = arith.constant 9.99999974E-6 : f32
    %11 = vector.broadcast %cst_7 : f32 to vector<1x128xf32>
    %12 = arith.addf %9, %11 : vector<1x128xf32>
    %13 = math.rsqrt %12 : vector<1x128xf32>
    %14 = arith.mulf %10, %13 : vector<1x128xf32>
    %c0_8 = arith.constant 0 : index
    %c0_9 = arith.constant 0 : index
    %15 = vector.load %arg5[%c0_8, %c0_9] : memref<1x128xf32, #tpu.memory_space<vmem>>, vector<1x128xf32>
    %16 = arith.mulf %2, %14 : vector<1x128xf32>
    %17 = arith.subf %15, %16 : vector<1x128xf32>
    %c0_10 = arith.constant 0 : index
    %c0_11 = arith.constant 0 : index
    %18 = vector.load %arg1[%c0_10, %c0_11] : memref<16x128xf32, #tpu.memory_space<vmem>>, vector<16x128xf32>
    %19 = vector.broadcast %14 : vector<1x128xf32> to vector<16x128xf32>
    %20 = arith.mulf %18, %19 : vector<16x128xf32>
    %21 = vector.broadcast %17 : vector<1x128xf32> to vector<16x128xf32>
    %22 = arith.addf %20, %21 : vector<16x128xf32>
    %23 = arith.truncf %22 : vector<16x128xf32> to vector<16x128xbf16>
    %c0_12 = arith.constant 0 : index
    %c0_13 = arith.constant 0 : index
    %24 = vector.load %arg6[%c0_12, %c0_13] : memref<128x128xf32, #tpu.memory_space<vmem>>, vector<128x128xf32>
    %25 = arith.truncf %24 : vector<128x128xf32> to vector<128x128xbf16>
    %cst_14 = arith.constant dense<0.000000e+00> : vector<16x128xf32>
    %26 = tpu.matmul %23, %25, %cst_14 {dimension_numbers = #tpu.dot_dimension_numbers<[1], [0], [0], [1], [0, 0, 1, 1], [], []>} : vector<16x128xbf16>, vector<128x128xbf16>, vector<16x128xf32> -> vector<16x128xf32>
    %27 = arith.truncf %26 : vector<16x128xf32> to vector<16x128xbf16>
    %c0_15 = arith.constant 0 : index
    %c0_16 = arith.constant 0 : index
    %28 = vector.load %arg7[%c0_15, %c0_16] : memref<16x128xbf16, #tpu.memory_space<vmem>>, vector<16x128xbf16>
    tpu.vector_store %arg7[%c0_15, %c0_16], %27 {strides = array<i32>} : memref<16x128xbf16, #tpu.memory_space<vmem>>, vector<16x128xbf16>,
    return
  }
  func.func @transform_0(%arg0: i32) -> (i32, i32) {
    %c0_i32 = arith.constant 0 : i32
    %c0_i32_0 = arith.constant 0 : i32
    return %arg0, %c0_i32 : i32, i32
  }
  func.func @transform_1(%arg0: i32) -> (i32, i32) {
    %c0_i32 = arith.constant 0 : i32
    %c0_i32_0 = arith.constant 0 : i32
    %c0_i32_1 = arith.constant 0 : i32
    return %c0_i32, %c0_i32_0 : i32, i32
  }
  func.func @transform_2(%arg0: i32) -> (i32, i32) {
    %c0_i32 = arith.constant 0 : i32
    %c0_i32_0 = arith.constant 0 : i32
    %c0_i32_1 = arith.constant 0 : i32
    return %c0_i32, %c0_i32_0 : i32, i32
  }
  func.func @transform_3(%arg0: i32) -> (i32, i32) {
    %c0_i32 = arith.constant 0 : i32
    %c0_i32_0 = arith.constant 0 : i32
    %c0_i32_1 = arith.constant 0 : i32
    return %c0_i32, %c0_i32_0 : i32, i32
  }
  func.func @transform_4(%arg0: i32) -> (i32, i32) {
    %c0_i32 = arith.constant 0 : i32
    %c0_i32_0 = arith.constant 0 : i32
    %c0_i32_1 = arith.constant 0 : i32
    return %c0_i32, %c0_i32_0 : i32, i32
  }
  func.func @transform_5(%arg0: i32) -> (i32, i32) {
    %c0_i32 = arith.constant 0 : i32
    %c0_i32_0 = arith.constant 0 : i32
    %c0_i32_1 = arith.constant 0 : i32
    return %c0_i32, %c0_i32_0 : i32, i32
  }
  func.func @transform_6(%arg0: i32) -> (i32, i32) {
    %c0_i32 = arith.constant 0 : i32
    %c0_i32_0 = arith.constant 0 : i32
    return %arg0, %c0_i32 : i32, i32
  }
}

module attributes {stable_mosaic.version = 11 : i64} {
  func.func @_linear_relu_kernel(%arg0: i32, %arg1: memref<16x128xf32, #tpu.memory_space<vmem>>, %arg2: memref<128x128xf32, #tpu.memory_space<vmem>>, %arg3: memref<1x128xf32, #tpu.memory_space<vmem>>, %arg4: memref<16x128xf32, #tpu.memory_space<vmem>>) attributes {dimension_semantics = [#tpu.dimension_semantics<parallel>], iteration_bounds = array<i64: 1>, scalar_prefetch = 0 : i64, scratch_operands = 0 : i64, tpu.core_type = #tpu.core_type<tc>, window_params = [{transform_indices = @transform_0, window_bounds = array<i64: 16, 128>}, {pipeline_mode = #tpu.pipeline_mode<synchronous>, transform_indices = @transform_1, window_bounds = array<i64: 128, 128>}, {pipeline_mode = #tpu.pipeline_mode<synchronous>, transform_indices = @transform_2, window_bounds = array<i64: 1, 128>}, {transform_indices = @transform_3, window_bounds = array<i64: 16, 128>}]} {
    %c0 = arith.constant 0 : index
    %c0_0 = arith.constant 0 : index
    %0 = vector.load %arg1[%c0, %c0_0] : memref<16x128xf32, #tpu.memory_space<vmem>>, vector<16x128xf32>
    %c0_1 = arith.constant 0 : index
    %c0_2 = arith.constant 0 : index
    %1 = vector.load %arg2[%c0_1, %c0_2] : memref<128x128xf32, #tpu.memory_space<vmem>>, vector<128x128xf32>
    %cst = arith.constant dense<0.000000e+00> : vector<16x128xf32>
    %2 = tpu.matmul %0, %1, %cst {dimension_numbers = #tpu.dot_dimension_numbers<[1], [0], [0], [1], [0, 0, 1, 1], [], []>} : vector<16x128xf32>, vector<128x128xf32>, vector<16x128xf32> -> vector<16x128xf32>
    %c0_3 = arith.constant 0 : index
    %c0_4 = arith.constant 0 : index
    %3 = vector.load %arg3[%c0_3, %c0_4] : memref<1x128xf32, #tpu.memory_space<vmem>>, vector<1x128xf32>
    %4 = vector.broadcast %3 : vector<1x128xf32> to vector<16x128xf32>
    %5 = arith.addf %2, %4 : vector<16x128xf32>
    %cst_5 = arith.constant 0.000000e+00 : f32
    %6 = vector.broadcast %cst_5 : f32 to vector<16x128xf32>
    %7 = arith.maximumf %5, %6 : vector<16x128xf32>
    %c0_6 = arith.constant 0 : index
    %c0_7 = arith.constant 0 : index
    %8 = vector.load %arg4[%c0_6, %c0_7] : memref<16x128xf32, #tpu.memory_space<vmem>>, vector<16x128xf32>
    tpu.vector_store %arg4[%c0_6, %c0_7], %7 {strides = array<i32>} : memref<16x128xf32, #tpu.memory_space<vmem>>, vector<16x128xf32>,
    return
  }
  func.func @transform_0(%arg0: i32) -> (i32, i32) {
    %c0_i32 = arith.constant 0 : i32
    %c0_i32_0 = arith.constant 0 : i32
    return %arg0, %c0_i32 : i32, i32
  }
  func.func @transform_1(%arg0: i32) -> (i32, i32) {
    %c0_i32 = arith.constant 0 : i32
    %c0_i32_0 = arith.constant 0 : i32
    %c0_i32_1 = arith.constant 0 : i32
    return %c0_i32, %c0_i32_0 : i32, i32
  }
  func.func @transform_2(%arg0: i32) -> (i32, i32) {
    %c0_i32 = arith.constant 0 : i32
    %c0_i32_0 = arith.constant 0 : i32
    %c0_i32_1 = arith.constant 0 : i32
    return %c0_i32, %c0_i32_0 : i32, i32
  }
  func.func @transform_3(%arg0: i32) -> (i32, i32) {
    %c0_i32 = arith.constant 0 : i32
    %c0_i32_0 = arith.constant 0 : i32
    return %arg0, %c0_i32 : i32, i32
  }
}

module attributes {stable_mosaic.version = 11 : i64} {
  func.func @_propagate_kernel(%arg0: i32, %arg1: i32, %arg2: memref<16x16xbf16, #tpu.memory_space<vmem>>, %arg3: memref<16x128xbf16, #tpu.memory_space<vmem>>, %arg4: memref<1x128xf32, #tpu.memory_space<vmem>>, %arg5: memref<16x128xf32, #tpu.memory_space<vmem>>, %arg6: memref<16x128xf32, #tpu.memory_space<vmem>>) attributes {dimension_semantics = [#tpu.dimension_semantics<parallel>, #tpu.dimension_semantics<arbitrary>], iteration_bounds = array<i64: 1, 1>, scalar_prefetch = 0 : i64, scratch_operands = 1 : i64, tpu.core_type = #tpu.core_type<tc>, window_params = [{transform_indices = @transform_0, window_bounds = array<i64: 16, 16>}, {transform_indices = @transform_1, window_bounds = array<i64: 16, 128>}, {pipeline_mode = #tpu.pipeline_mode<synchronous>, transform_indices = @transform_2, window_bounds = array<i64: 1, 128>}, {transform_indices = @transform_3, window_bounds = array<i64: 16, 128>}]} {
    %c0_i32 = arith.constant 0 : i32
    %0 = arith.cmpi eq, %arg1, %c0_i32 : i32
    %1 = arith.extui %0 : i1 to i32
    %c0_i32_0 = arith.constant 0 : i32
    %2 = arith.cmpi ne, %1, %c0_i32_0 : i32
    scf.if %2 {
      %cst_10 = arith.constant 0.000000e+00 : f32
      %12 = vector.broadcast %cst_10 : f32 to vector<16x128xf32>
      %c0_11 = arith.constant 0 : index
      %c0_12 = arith.constant 0 : index
      %13 = vector.load %arg6[%c0_11, %c0_12] : memref<16x128xf32, #tpu.memory_space<vmem>>, vector<16x128xf32>
      tpu.vector_store %arg6[%c0_11, %c0_12], %12 {strides = array<i32>} : memref<16x128xf32, #tpu.memory_space<vmem>>, vector<16x128xf32>,
    } else {
    }
    %c0 = arith.constant 0 : index
    %c0_1 = arith.constant 0 : index
    %3 = vector.load %arg6[%c0, %c0_1] : memref<16x128xf32, #tpu.memory_space<vmem>>, vector<16x128xf32>
    %c0_2 = arith.constant 0 : index
    %c0_3 = arith.constant 0 : index
    %4 = vector.load %arg2[%c0_2, %c0_3] : memref<16x16xbf16, #tpu.memory_space<vmem>>, vector<16x16xbf16>
    %c0_4 = arith.constant 0 : index
    %c0_5 = arith.constant 0 : index
    %5 = vector.load %arg3[%c0_4, %c0_5] : memref<16x128xbf16, #tpu.memory_space<vmem>>, vector<16x128xbf16>
    %cst = arith.constant dense<0.000000e+00> : vector<16x128xf32>
    %6 = tpu.matmul %4, %5, %cst {dimension_numbers = #tpu.dot_dimension_numbers<[1], [0], [0], [1], [0, 0, 1, 1], [], []>} : vector<16x16xbf16>, vector<16x128xbf16>, vector<16x128xf32> -> vector<16x128xf32>
    %7 = arith.addf %3, %6 : vector<16x128xf32>
    %c0_6 = arith.constant 0 : index
    %c0_7 = arith.constant 0 : index
    %8 = vector.load %arg6[%c0_6, %c0_7] : memref<16x128xf32, #tpu.memory_space<vmem>>, vector<16x128xf32>
    tpu.vector_store %arg6[%c0_6, %c0_7], %7 {strides = array<i32>} : memref<16x128xf32, #tpu.memory_space<vmem>>, vector<16x128xf32>,
    %c0_i32_8 = arith.constant 0 : i32
    %9 = arith.cmpi eq, %arg1, %c0_i32_8 : i32
    %10 = arith.extui %9 : i1 to i32
    %c0_i32_9 = arith.constant 0 : i32
    %11 = arith.cmpi ne, %10, %c0_i32_9 : i32
    scf.if %11 {
      %c0_10 = arith.constant 0 : index
      %c0_11 = arith.constant 0 : index
      %12 = vector.load %arg6[%c0_10, %c0_11] : memref<16x128xf32, #tpu.memory_space<vmem>>, vector<16x128xf32>
      %c0_12 = arith.constant 0 : index
      %c0_13 = arith.constant 0 : index
      %13 = vector.load %arg4[%c0_12, %c0_13] : memref<1x128xf32, #tpu.memory_space<vmem>>, vector<1x128xf32>
      %14 = vector.broadcast %13 : vector<1x128xf32> to vector<16x128xf32>
      %15 = arith.addf %12, %14 : vector<16x128xf32>
      %c0_14 = arith.constant 0 : index
      %c0_15 = arith.constant 0 : index
      %16 = vector.load %arg5[%c0_14, %c0_15] : memref<16x128xf32, #tpu.memory_space<vmem>>, vector<16x128xf32>
      tpu.vector_store %arg5[%c0_14, %c0_15], %15 {strides = array<i32>} : memref<16x128xf32, #tpu.memory_space<vmem>>, vector<16x128xf32>,
    } else {
    }
    return
  }
  func.func @transform_0(%arg0: i32, %arg1: i32) -> (i32, i32) {
    %c0_i32 = arith.constant 0 : i32
    return %arg0, %arg1 : i32, i32
  }
  func.func @transform_1(%arg0: i32, %arg1: i32) -> (i32, i32) {
    %c0_i32 = arith.constant 0 : i32
    %c0_i32_0 = arith.constant 0 : i32
    return %arg1, %c0_i32 : i32, i32
  }
  func.func @transform_2(%arg0: i32, %arg1: i32) -> (i32, i32) {
    %c0_i32 = arith.constant 0 : i32
    %c0_i32_0 = arith.constant 0 : i32
    %c0_i32_1 = arith.constant 0 : i32
    return %c0_i32, %c0_i32_0 : i32, i32
  }
  func.func @transform_3(%arg0: i32, %arg1: i32) -> (i32, i32) {
    %c0_i32 = arith.constant 0 : i32
    %c0_i32_0 = arith.constant 0 : i32
    return %arg0, %c0_i32 : i32, i32
  }
}

module attributes {stable_mosaic.version = 11 : i64} {
  func.func @_matmul_kernel(%arg0: i32, %arg1: memref<16x128xf32, #tpu.memory_space<vmem>>, %arg2: memref<128x128xf32, #tpu.memory_space<vmem>>, %arg3: memref<16x128xbf16, #tpu.memory_space<vmem>>) attributes {dimension_semantics = [#tpu.dimension_semantics<parallel>], iteration_bounds = array<i64: 1>, scalar_prefetch = 0 : i64, scratch_operands = 0 : i64, tpu.core_type = #tpu.core_type<tc>, window_params = [{transform_indices = @transform_0, window_bounds = array<i64: 16, 128>}, {pipeline_mode = #tpu.pipeline_mode<synchronous>, transform_indices = @transform_1, window_bounds = array<i64: 128, 128>}, {transform_indices = @transform_2, window_bounds = array<i64: 16, 128>}]} {
    %c0 = arith.constant 0 : index
    %c0_0 = arith.constant 0 : index
    %0 = vector.load %arg1[%c0, %c0_0] : memref<16x128xf32, #tpu.memory_space<vmem>>, vector<16x128xf32>
    %1 = arith.truncf %0 : vector<16x128xf32> to vector<16x128xbf16>
    %c0_1 = arith.constant 0 : index
    %c0_2 = arith.constant 0 : index
    %2 = vector.load %arg2[%c0_1, %c0_2] : memref<128x128xf32, #tpu.memory_space<vmem>>, vector<128x128xf32>
    %3 = arith.truncf %2 : vector<128x128xf32> to vector<128x128xbf16>
    %cst = arith.constant dense<0.000000e+00> : vector<16x128xf32>
    %4 = tpu.matmul %1, %3, %cst {dimension_numbers = #tpu.dot_dimension_numbers<[1], [0], [0], [1], [0, 0, 1, 1], [], []>} : vector<16x128xbf16>, vector<128x128xbf16>, vector<16x128xf32> -> vector<16x128xf32>
    %5 = arith.truncf %4 : vector<16x128xf32> to vector<16x128xbf16>
    %c0_3 = arith.constant 0 : index
    %c0_4 = arith.constant 0 : index
    %6 = vector.load %arg3[%c0_3, %c0_4] : memref<16x128xbf16, #tpu.memory_space<vmem>>, vector<16x128xbf16>
    tpu.vector_store %arg3[%c0_3, %c0_4], %5 {strides = array<i32>} : memref<16x128xbf16, #tpu.memory_space<vmem>>, vector<16x128xbf16>,
    return
  }
  func.func @transform_0(%arg0: i32) -> (i32, i32) {
    %c0_i32 = arith.constant 0 : i32
    %c0_i32_0 = arith.constant 0 : i32
    return %arg0, %c0_i32 : i32, i32
  }
  func.func @transform_1(%arg0: i32) -> (i32, i32) {
    %c0_i32 = arith.constant 0 : i32
    %c0_i32_0 = arith.constant 0 : i32
    %c0_i32_1 = arith.constant 0 : i32
    return %c0_i32, %c0_i32_0 : i32, i32
  }
  func.func @transform_2(%arg0: i32) -> (i32, i32) {
    %c0_i32 = arith.constant 0 : i32
    %c0_i32_0 = arith.constant 0 : i32
    return %arg0, %c0_i32 : i32, i32
  }
}

module attributes {stable_mosaic.version = 11 : i64} {
  func.func @_bn_linear_kernel(%arg0: i32, %arg1: memref<16x128xf32, #tpu.memory_space<vmem>>, %arg2: memref<1x128xf32, #tpu.memory_space<vmem>>, %arg3: memref<1x128xf32, #tpu.memory_space<vmem>>, %arg4: memref<1x128xf32, #tpu.memory_space<vmem>>, %arg5: memref<1x128xf32, #tpu.memory_space<vmem>>, %arg6: memref<128x128xf32, #tpu.memory_space<vmem>>, %arg7: memref<1x128xf32, #tpu.memory_space<vmem>>, %arg8: memref<16x128xf32, #tpu.memory_space<vmem>>) attributes {dimension_semantics = [#tpu.dimension_semantics<parallel>], iteration_bounds = array<i64: 1>, scalar_prefetch = 0 : i64, scratch_operands = 0 : i64, tpu.core_type = #tpu.core_type<tc>, window_params = [{transform_indices = @transform_0, window_bounds = array<i64: 16, 128>}, {pipeline_mode = #tpu.pipeline_mode<synchronous>, transform_indices = @transform_1, window_bounds = array<i64: 1, 128>}, {pipeline_mode = #tpu.pipeline_mode<synchronous>, transform_indices = @transform_2, window_bounds = array<i64: 1, 128>}, {pipeline_mode = #tpu.pipeline_mode<synchronous>, transform_indices = @transform_3, window_bounds = array<i64: 1, 128>}, {pipeline_mode = #tpu.pipeline_mode<synchronous>, transform_indices = @transform_4, window_bounds = array<i64: 1, 128>}, {pipeline_mode = #tpu.pipeline_mode<synchronous>, transform_indices = @transform_5, window_bounds = array<i64: 128, 128>}, {pipeline_mode = #tpu.pipeline_mode<synchronous>, transform_indices = @transform_6, window_bounds = array<i64: 1, 128>}, {transform_indices = @transform_7, window_bounds = array<i64: 16, 128>}]} {
    %c0 = arith.constant 0 : index
    %c0_0 = arith.constant 0 : index
    %0 = vector.load %arg2[%c0, %c0_0] : memref<1x128xf32, #tpu.memory_space<vmem>>, vector<1x128xf32>
    %cst = arith.constant 6.250000e-02 : f32
    %1 = vector.broadcast %cst : f32 to vector<1x128xf32>
    %2 = arith.mulf %0, %1 : vector<1x128xf32>
    %c0_1 = arith.constant 0 : index
    %c0_2 = arith.constant 0 : index
    %3 = vector.load %arg3[%c0_1, %c0_2] : memref<1x128xf32, #tpu.memory_space<vmem>>, vector<1x128xf32>
    %cst_3 = arith.constant 6.250000e-02 : f32
    %4 = vector.broadcast %cst_3 : f32 to vector<1x128xf32>
    %5 = arith.mulf %3, %4 : vector<1x128xf32>
    %6 = arith.mulf %2, %2 : vector<1x128xf32>
    %7 = arith.subf %5, %6 : vector<1x128xf32>
    %cst_4 = arith.constant 0.000000e+00 : f32
    %8 = vector.broadcast %cst_4 : f32 to vector<1x128xf32>
    %9 = arith.maximumf %7, %8 : vector<1x128xf32>
    %c0_5 = arith.constant 0 : index
    %c0_6 = arith.constant 0 : index
    %10 = vector.load %arg4[%c0_5, %c0_6] : memref<1x128xf32, #tpu.memory_space<vmem>>, vector<1x128xf32>
    %cst_7 = arith.constant 9.99999974E-6 : f32
    %11 = vector.broadcast %cst_7 : f32 to vector<1x128xf32>
    %12 = arith.addf %9, %11 : vector<1x128xf32>
    %13 = math.rsqrt %12 : vector<1x128xf32>
    %14 = arith.mulf %10, %13 : vector<1x128xf32>
    %c0_8 = arith.constant 0 : index
    %c0_9 = arith.constant 0 : index
    %15 = vector.load %arg5[%c0_8, %c0_9] : memref<1x128xf32, #tpu.memory_space<vmem>>, vector<1x128xf32>
    %16 = arith.mulf %2, %14 : vector<1x128xf32>
    %17 = arith.subf %15, %16 : vector<1x128xf32>
    %c0_10 = arith.constant 0 : index
    %c0_11 = arith.constant 0 : index
    %18 = vector.load %arg1[%c0_10, %c0_11] : memref<16x128xf32, #tpu.memory_space<vmem>>, vector<16x128xf32>
    %19 = vector.broadcast %14 : vector<1x128xf32> to vector<16x128xf32>
    %20 = arith.mulf %18, %19 : vector<16x128xf32>
    %21 = vector.broadcast %17 : vector<1x128xf32> to vector<16x128xf32>
    %22 = arith.addf %20, %21 : vector<16x128xf32>
    %c0_12 = arith.constant 0 : index
    %c0_13 = arith.constant 0 : index
    %23 = vector.load %arg6[%c0_12, %c0_13] : memref<128x128xf32, #tpu.memory_space<vmem>>, vector<128x128xf32>
    %cst_14 = arith.constant dense<0.000000e+00> : vector<16x128xf32>
    %24 = tpu.matmul %22, %23, %cst_14 {dimension_numbers = #tpu.dot_dimension_numbers<[1], [0], [0], [1], [0, 0, 1, 1], [], []>} : vector<16x128xf32>, vector<128x128xf32>, vector<16x128xf32> -> vector<16x128xf32>
    %c0_15 = arith.constant 0 : index
    %c0_16 = arith.constant 0 : index
    %25 = vector.load %arg7[%c0_15, %c0_16] : memref<1x128xf32, #tpu.memory_space<vmem>>, vector<1x128xf32>
    %26 = vector.broadcast %25 : vector<1x128xf32> to vector<16x128xf32>
    %27 = arith.addf %24, %26 : vector<16x128xf32>
    %c0_17 = arith.constant 0 : index
    %c0_18 = arith.constant 0 : index
    %28 = vector.load %arg8[%c0_17, %c0_18] : memref<16x128xf32, #tpu.memory_space<vmem>>, vector<16x128xf32>
    tpu.vector_store %arg8[%c0_17, %c0_18], %27 {strides = array<i32>} : memref<16x128xf32, #tpu.memory_space<vmem>>, vector<16x128xf32>,
    return
  }
  func.func @transform_0(%arg0: i32) -> (i32, i32) {
    %c0_i32 = arith.constant 0 : i32
    %c0_i32_0 = arith.constant 0 : i32
    return %arg0, %c0_i32 : i32, i32
  }
  func.func @transform_1(%arg0: i32) -> (i32, i32) {
    %c0_i32 = arith.constant 0 : i32
    %c0_i32_0 = arith.constant 0 : i32
    %c0_i32_1 = arith.constant 0 : i32
    return %c0_i32, %c0_i32_0 : i32, i32
  }
  func.func @transform_2(%arg0: i32) -> (i32, i32) {
    %c0_i32 = arith.constant 0 : i32
    %c0_i32_0 = arith.constant 0 : i32
    %c0_i32_1 = arith.constant 0 : i32
    return %c0_i32, %c0_i32_0 : i32, i32
  }
  func.func @transform_3(%arg0: i32) -> (i32, i32) {
    %c0_i32 = arith.constant 0 : i32
    %c0_i32_0 = arith.constant 0 : i32
    %c0_i32_1 = arith.constant 0 : i32
    return %c0_i32, %c0_i32_0 : i32, i32
  }
  func.func @transform_4(%arg0: i32) -> (i32, i32) {
    %c0_i32 = arith.constant 0 : i32
    %c0_i32_0 = arith.constant 0 : i32
    %c0_i32_1 = arith.constant 0 : i32
    return %c0_i32, %c0_i32_0 : i32, i32
  }
  func.func @transform_5(%arg0: i32) -> (i32, i32) {
    %c0_i32 = arith.constant 0 : i32
    %c0_i32_0 = arith.constant 0 : i32
    %c0_i32_1 = arith.constant 0 : i32
    return %c0_i32, %c0_i32_0 : i32, i32
  }
  func.func @transform_6(%arg0: i32) -> (i32, i32) {
    %c0_i32 = arith.constant 0 : i32
    %c0_i32_0 = arith.constant 0 : i32
    %c0_i32_1 = arith.constant 0 : i32
    return %c0_i32, %c0_i32_0 : i32, i32
  }
  func.func @transform_7(%arg0: i32) -> (i32, i32) {
    %c0_i32 = arith.constant 0 : i32
    %c0_i32_0 = arith.constant 0 : i32
    return %arg0, %c0_i32 : i32, i32
  }
}

</mosaic_0001>

<llo_original>
// kernel: gnn_forward.9
$region0: #{gnn_forward.9}
  #allocation0 [shape = 'u32[]', space=smem, size = 0x4, offset = 0x4, fixed_abs, tag = 'smem constant byte address 0x4 - core index']
  #allocation1 [shape = 'u32[144,128]{1,0:T(1,128)}', space=vmem, size = 0x12000, scoped, tag = 'internal scratch']
  %s0 = inlined_call_operand.vmem [shape: f32[16,128], index: 0, kind: input, shape index: {}]
  %s1 = inlined_call_operand.vmem [shape: f32[1,128], index: 1, kind: output, shape index: {0}]
  %s2 = inlined_call_operand.vmem [shape: f32[1,128], index: 2, kind: output, shape index: {1}]
  %3 = xla_tuple %s1, %s2
  %s4 = sld [smem:[#allocation0]]
  $region26: #{gnn_forward.9} parent=0
    _
  %s6 = ssub.s32 1, %s4
  %s7 = scalar_select 0, %s6, %s4
  // Predicated region
  $region2: #{gnn_forward.9} parent=0 // pred_check
    _
  $region3: #{gnn_forward.9} parent=0 // pred_check_branch
    %9 = sbr.rel (0) target = $region5
  $region4: #{gnn_forward.9} parent=0 // pred_region
    _
  $region5: #{gnn_forward.9} parent=0 // pred_fallthru
    _
  %p10 = scmp.eq.s32.totalorder 0, 0
  // Predicated region
  $region6: #{gnn_forward.9} parent=0 // pred_check
    %p11 = pneg %p10
  $region7: #{gnn_forward.9} parent=0 // pred_check_branch
    %13 = sbr.rel (%p11) target = $region9
  $region8: #{gnn_forward.9} parent=0 // pred_region
    %14 = vst [vmem:[%s1] sm:$0x1] 0.0
    %15 = vst [vmem:[%s2] sm:$0x1] 0.0
  $region9: #{gnn_forward.9} parent=0 // pred_fallthru
    _
  %v16 = vld [vmem:[%s0] sm:$0xff]
  %v17 = vld [vmem:[%s0 + $0x8] sm:$0xff]
  %s18 = smul.u32 0, 16
  %v19 = vlaneseq
  %v20 = vshrl.u32 %v19, 7
  %v21 = vadd.s32 %v20, 8
  %v22 = vstv %s18
  %v23 = vadd.s32 %v22, %v20
  %v24 = vadd.s32 %v22, %v21
  %vm25 = vcmp.lt.s32.totalorder %v23, 16
  %vm26 = vcmp.lt.s32.totalorder %v24, 16
  %v27 = vsel %vm25, %v16, 0.0
  %v28 = vsel %vm26, %v17, 0.0
  %v29 = vld [vmem:[%s1] sm:$0x1]
  %v30 = vadd.f32 %v27, %v28
  %v31 = vrot.slane %v30, 4
  %v32 = vadd.f32 %v30, %v31
  %v33 = vrot.slane %v32, 2
  %v34 = vadd.f32 %v32, %v33
  %v35 = vrot.slane %v34, 1
  %v36 = vadd.f32 %v34, %v35
  %v37 = vadd.f32 %v29, %v36
  %38 = vst [vmem:[%s1] sm:$0x1] %v37
  %v39 = vld [vmem:[%s2] sm:$0x1]
  %v40 = vmul.f32 %v27, %v27
  %v41 = vmul.f32 %v28, %v28
  %v42 = vadd.f32 %v40, %v41
  %v43 = vrot.slane %v42, 4
  %v44 = vadd.f32 %v42, %v43
  %v45 = vrot.slane %v44, 2
  %v46 = vadd.f32 %v44, %v45
  %v47 = vrot.slane %v46, 1
  %v48 = vadd.f32 %v46, %v47
  %v49 = vadd.f32 %v39, %v48
  %50 = vst [vmem:[%s2] sm:$0x1] %v49
  // Predicated region
  $region10: #{gnn_forward.9} parent=0 // pred_check
    _
  $region11: #{gnn_forward.9} parent=0 // pred_check_branch
    %52 = sbr.rel (0) target = $region13
  $region12: #{gnn_forward.9} parent=0 // pred_region
    _
  $region13: #{gnn_forward.9} parent=0 // pred_fallthru
    _
  // Predicated region
  $region14: #{gnn_forward.9} parent=0 // pred_check
    _
  $region15: #{gnn_forward.9} parent=0 // pred_check_branch
    %54 = sbr.rel (0) target = $region17
  $region16: #{gnn_forward.9} parent=0 // pred_region
    _
  $region17: #{gnn_forward.9} parent=0 // pred_fallthru
    _
  // Predicated region
  $region18: #{gnn_forward.9} parent=0 // pred_check
    _
  $region19: #{gnn_forward.9} parent=0 // pred_check_branch
    %56 = sbr.rel (0) target = $region21
  $region20: #{gnn_forward.9} parent=0 // pred_region
    _
  $region21: #{gnn_forward.9} parent=0 // pred_fallthru
    _
  // Predicated region
  $region22: #{gnn_forward.9} parent=0 // pred_check
    _
  $region23: #{gnn_forward.9} parent=0 // pred_check_branch
    %58 = sbr.rel (0) target = $region25
  $region24: #{gnn_forward.9} parent=0 // pred_region
    _
  $region25: #{gnn_forward.9} parent=0 // pred_fallthru
    _

// kernel: gnn_forward.10
$region0: #{gnn_forward.10}
  #allocation0 [shape = 'u32[]', space=smem, size = 0x4, offset = 0x4, fixed_abs, tag = 'smem constant byte address 0x4 - core index']
  #allocation1 [shape = 'u32[144,128]{1,0:T(1,128)}', space=vmem, size = 0x12000, scoped, tag = 'internal scratch']
  %s0 = inlined_call_operand.vmem [shape: f32[16,128], index: 0, kind: input, shape index: {}]
  %s1 = inlined_call_operand.vmem [shape: f32[1,128], index: 1, kind: input, shape index: {}]
  %s2 = inlined_call_operand.vmem [shape: f32[1,128], index: 2, kind: input, shape index: {}]
  %s3 = inlined_call_operand.vmem [shape: f32[1,128], index: 3, kind: input, shape index: {}]
  %s4 = inlined_call_operand.vmem [shape: f32[1,128], index: 4, kind: input, shape index: {}]
  %s5 = inlined_call_operand.vmem [shape: f32[128,128], index: 5, kind: input, shape index: {}]
  %s6 = inlined_call_operand.vmem [shape: bf16[16,128], index: 6, kind: output, shape index: {}]
  %s7 = sld [smem:[#allocation0]]
  $region34: #{gnn_forward.10} parent=0
    _
  %s9 = ssub.s32 1, %s7
  %s10 = scalar_select 0, %s9, %s7
  // Predicated region
  $region2: #{gnn_forward.10} parent=0 // pred_check
    _
  $region3: #{gnn_forward.10} parent=0 // pred_check_branch
    %12 = sbr.rel (0) target = $region5
  $region4: #{gnn_forward.10} parent=0 // pred_region
    _
  $region5: #{gnn_forward.10} parent=0 // pred_fallthru
    _
  // Predicated region
  $region6: #{gnn_forward.10} parent=0 // pred_check
    _
  $region7: #{gnn_forward.10} parent=0 // pred_check_branch
    %14 = sbr.rel (0) target = $region9
  $region8: #{gnn_forward.10} parent=0 // pred_region
    _
  $region9: #{gnn_forward.10} parent=0 // pred_fallthru
    _
  // Predicated region
  $region10: #{gnn_forward.10} parent=0 // pred_check
    _
  $region11: #{gnn_forward.10} parent=0 // pred_check_branch
    %16 = sbr.rel (0) target = $region13
  $region12: #{gnn_forward.10} parent=0 // pred_region
    _
  $region13: #{gnn_forward.10} parent=0 // pred_fallthru
    _
  // Predicated region
  $region14: #{gnn_forward.10} parent=0 // pred_check
    _
  $region15: #{gnn_forward.10} parent=0 // pred_check_branch
    %18 = sbr.rel (0) target = $region17
  $region16: #{gnn_forward.10} parent=0 // pred_region
    _
  $region17: #{gnn_forward.10} parent=0 // pred_fallthru
    _
  // Predicated region
  $region18: #{gnn_forward.10} parent=0 // pred_check
    _
  $region19: #{gnn_forward.10} parent=0 // pred_check_branch
    %20 = sbr.rel (0) target = $region21
  $region20: #{gnn_forward.10} parent=0 // pred_region
    _
  $region21: #{gnn_forward.10} parent=0 // pred_fallthru
    _
  // Predicated region
  $region22: #{gnn_forward.10} parent=0 // pred_check
    _
  $region23: #{gnn_forward.10} parent=0 // pred_check_branch
    %22 = sbr.rel (0) target = $region25
  $region24: #{gnn_forward.10} parent=0 // pred_region
    _
  $region25: #{gnn_forward.10} parent=0 // pred_fallthru
    _
  %v24 = vld [vmem:[%s1] sm:$0x1]
  %v25 = vmul.f32 %v24, 0.0625
  %v26 = vld [vmem:[%s2] sm:$0x1]
  %v27 = vmul.f32 %v26, 0.0625
  %v28 = vmul.f32 %v25, %v25
  %v29 = vsub.f32 %v27, %v28
  %v30 = vmax.f32 %v29, 0.0
  %v31 = vld [vmem:[%s3] sm:$0x1]
  %v32 = vadd.f32 %v30, 1e-05
  %v33 = vrsqrt.pop %v32
  %v34 = vmul.f32 %v31, %v33
  %v35 = vld [vmem:[%s4] sm:$0x1]
  %v36 = vmul.f32 %v25, %v34
  %v37 = vsub.f32 %v35, %v36
  %v38 = vld [vmem:[%s0] sm:$0xff]
  %v39 = vld [vmem:[%s0 + $0x8] sm:$0xff]
  %v41 = vlaneseq
  %v42 = vshrl.u32 %v41, 7
  %v43 = vsub.s32 0, %v42
  %v44 = vrot.slane %v34, %v43
  %v46 = vmul.f32 %v38, %v44
  %v47 = vmul.f32 %v39, %v44
  %v49 = vlaneseq
  %v50 = vshrl.u32 %v49, 7
  %v51 = vsub.s32 0, %v50
  %v52 = vrot.slane %v37, %v51
  %v54 = vadd.f32 %v46, %v52
  %v55 = vadd.f32 %v47, %v52
  %v56 = vpack.c.bf16 %v55, %v54
  %v57 = vld [vmem:[%s5] sm:$0xff]
  %v58 = vld [vmem:[%s5 + $0x8] sm:$0xff]
  %v59 = vld [vmem:[%s5 + $0x10] sm:$0xff]
  %v60 = vld [vmem:[%s5 + $0x18] sm:$0xff]
  %v61 = vld [vmem:[%s5 + $0x20] sm:$0xff]
  %v62 = vld [vmem:[%s5 + $0x28] sm:$0xff]
  %v63 = vld [vmem:[%s5 + $0x30] sm:$0xff]
  %v64 = vld [vmem:[%s5 + $0x38] sm:$0xff]
  %v65 = vld [vmem:[%s5 + $0x40] sm:$0xff]
  %v66 = vld [vmem:[%s5 + $0x48] sm:$0xff]
  %v67 = vld [vmem:[%s5 + $0x50] sm:$0xff]
  %v68 = vld [vmem:[%s5 + $0x58] sm:$0xff]
  %v69 = vld [vmem:[%s5 + $0x60] sm:$0xff]
  %v70 = vld [vmem:[%s5 + $0x68] sm:$0xff]
  %v71 = vld [vmem:[%s5 + $0x70] sm:$0xff]
  %v72 = vld [vmem:[%s5 + $0x78] sm:$0xff]
  %v73 = vpack.c.bf16 %v58, %v57
  %v74 = vpack.c.bf16 %v60, %v59
  %v75 = vpack.c.bf16 %v62, %v61
  %v76 = vpack.c.bf16 %v64, %v63
  %v77 = vpack.c.bf16 %v66, %v65
  %v78 = vpack.c.bf16 %v68, %v67
  %v79 = vpack.c.bf16 %v70, %v69
  %v80 = vpack.c.bf16 %v72, %v71
  %81 = vmatprep.subr.bf16.mxu0 0
  %82 = vmatpush1.bf16.msra.mxu0 %v73
  %83 = vmatprep.subr.bf16.mxu0 0
  %84 = vmatpush1.bf16.msra.mxu0 %v74
  %85 = vmatprep.subr.bf16.mxu0 0
  %86 = vmatpush1.bf16.msra.mxu0 %v75
  %87 = vmatprep.subr.bf16.mxu0 0
  %88 = vmatpush1.bf16.msra.mxu0 %v76
  %89 = vmatprep.subr.bf16.mxu0 0
  %90 = vmatpush1.bf16.msra.mxu0 %v77
  %91 = vmatprep.subr.bf16.mxu0 0
  %92 = vmatpush1.bf16.msra.mxu0 %v78
  %93 = vmatprep.subr.bf16.mxu0 0
  %94 = vmatpush1.bf16.msra.mxu0 %v79
  %95 = vmatprep.subr.bf16.mxu0 0
  %96 = vmatpush1.bf16.msra.mxu0 %v80
  %97 = vmatprep.subr.bf16.mxu0 0
  %98 = vmatpush1.bf16.msra.mxu0 0
  %99 = vmatprep.subr.bf16.mxu0 0
  %100 = vmatpush1.bf16.msra.mxu0 0
  %101 = vmatprep.subr.bf16.mxu0 0
  %102 = vmatpush1.bf16.msra.mxu0 0
  %103 = vmatprep.subr.bf16.mxu0 0
  %104 = vmatpush1.bf16.msra.mxu0 0
  %105 = vmatprep.subr.bf16.mxu0 0
  %106 = vmatpush1.bf16.msra.mxu0 0
  %107 = vmatprep.subr.bf16.mxu0 0
  %108 = vmatpush1.bf16.msra.mxu0 0
  %109 = vmatprep.subr.bf16.mxu0 0
  %110 = vmatpush1.bf16.msra.mxu0 0
  %111 = vmatprep.subr.bf16.mxu0 0
  %112 = vmatpush1.bf16.msra.mxu0 0
  %113 = vmatprep.mubr.bf16.mxu0 0
  %114 = vmatmul.mubr.bf16.gmra.mrb[0].mxu0 %v56
  %v115 = vpop.f32.mrb[0].mxu0
  %v116 = vadd.f32 0.0, %v115
  %v117 = vpop.f32.mrb[0].mxu0
  %v118 = vpop.f32.mrb[0].mxu0
  %v119 = vadd.f32 0.0, %v118
  %v120 = vpop.f32.mrb[0].mxu0
  %121 = vdwg.mxu0
  %v122 = vpack.c.bf16 %v119, %v116
  %v124 = vunpack.c.l.b16 %v122
  %v125 = vunpack.c.h.b16 %v122
  %v126 = vpack.c.b16 %v124, %v124
  %v127 = vpack.c.b16 %v125, %v125
  %130 = vst [vmem:[%s6] sm:$0xf] %v126
  %131 = vst [vmem:[%s6 + $0x4] sm:$0xf] %v127
  // Predicated region
  $region26: #{gnn_forward.10} parent=0 // pred_check
    _
  $region27: #{gnn_forward.10} parent=0 // pred_check_branch
    %133 = sbr.rel (0) target = $region29
  $region28: #{gnn_forward.10} parent=0 // pred_region
    _
  $region29: #{gnn_forward.10} parent=0 // pred_fallthru
    _
  // Predicated region
  $region30: #{gnn_forward.10} parent=0 // pred_check
    _
  $region31: #{gnn_forward.10} parent=0 // pred_check_branch
    %135 = sbr.rel (0) target = $region33
  $region32: #{gnn_forward.10} parent=0 // pred_region
    _
  $region33: #{gnn_forward.10} parent=0 // pred_fallthru
    _

// kernel: gnn_forward.8
$region0: #{gnn_forward.8}
  #allocation0 [shape = 'u32[]', space=smem, size = 0x4, offset = 0x4, fixed_abs, tag = 'smem constant byte address 0x4 - core index']
  #allocation1 [shape = 'u32[144,128]{1,0:T(1,128)}', space=vmem, size = 0x12000, scoped, tag = 'internal scratch']
  %s0 = inlined_call_operand.vmem [shape: f32[16,128], index: 0, kind: input, shape index: {}]
  %s1 = inlined_call_operand.vmem [shape: f32[128,128], index: 1, kind: input, shape index: {}]
  %s2 = inlined_call_operand.vmem [shape: f32[1,128], index: 2, kind: input, shape index: {}]
  %s3 = inlined_call_operand.vmem [shape: f32[16,128], index: 3, kind: output, shape index: {}]
  %s4 = sld [smem:[#allocation0]]
  $region22: #{gnn_forward.8} parent=0
    _
  %s6 = ssub.s32 1, %s4
  %s7 = scalar_select 0, %s6, %s4
  // Predicated region
  $region2: #{gnn_forward.8} parent=0 // pred_check
    _
  $region3: #{gnn_forward.8} parent=0 // pred_check_branch
    %9 = sbr.rel (0) target = $region5
  $region4: #{gnn_forward.8} parent=0 // pred_region
    _
  $region5: #{gnn_forward.8} parent=0 // pred_fallthru
    _
  // Predicated region
  $region6: #{gnn_forward.8} parent=0 // pred_check
    _
  $region7: #{gnn_forward.8} parent=0 // pred_check_branch
    %11 = sbr.rel (0) target = $region9
  $region8: #{gnn_forward.8} parent=0 // pred_region
    _
  $region9: #{gnn_forward.8} parent=0 // pred_fallthru
    _
  // Predicated region
  $region10: #{gnn_forward.8} parent=0 // pred_check
    _
  $region11: #{gnn_forward.8} parent=0 // pred_check_branch
    %13 = sbr.rel (0) target = $region13
  $region12: #{gnn_forward.8} parent=0 // pred_region
    _
  $region13: #{gnn_forward.8} parent=0 // pred_fallthru
    _
  %v14 = vld [vmem:[%s0] sm:$0xff]
  %v15 = vld [vmem:[%s0 + $0x8] sm:$0xff]
  %v16 = vld [vmem:[%s1] sm:$0xff]
  %v17 = vld [vmem:[%s1 + $0x8] sm:$0xff]
  %v18 = vld [vmem:[%s1 + $0x10] sm:$0xff]
  %v19 = vld [vmem:[%s1 + $0x18] sm:$0xff]
  %v20 = vld [vmem:[%s1 + $0x20] sm:$0xff]
  %v21 = vld [vmem:[%s1 + $0x28] sm:$0xff]
  %v22 = vld [vmem:[%s1 + $0x30] sm:$0xff]
  %v23 = vld [vmem:[%s1 + $0x38] sm:$0xff]
  %v24 = vld [vmem:[%s1 + $0x40] sm:$0xff]
  %v25 = vld [vmem:[%s1 + $0x48] sm:$0xff]
  %v26 = vld [vmem:[%s1 + $0x50] sm:$0xff]
  %v27 = vld [vmem:[%s1 + $0x58] sm:$0xff]
  %v28 = vld [vmem:[%s1 + $0x60] sm:$0xff]
  %v29 = vld [vmem:[%s1 + $0x68] sm:$0xff]
  %v30 = vld [vmem:[%s1 + $0x70] sm:$0xff]
  %v31 = vld [vmem:[%s1 + $0x78] sm:$0xff]
  %v32 = vld [vmem:[%s2] sm:$0x1]
  %v34 = vlaneseq
  %v35 = vshrl.u32 %v34, 7
  %v36 = vsub.s32 0, %v35
  %v37 = vrot.slane %v32, %v36
  %39 = vmatprep.subr.mxu0 0.0
  %40 = vmatpush1.msra.mxu0 %v16
  %41 = vmatprep.subr.mxu0 0.0
  %42 = vmatpush1.msra.mxu0 %v17
  %43 = vmatprep.subr.mxu0 0.0
  %44 = vmatpush1.msra.mxu0 %v18
  %45 = vmatprep.subr.mxu0 0.0
  %46 = vmatpush1.msra.mxu0 %v19
  %47 = vmatprep.subr.mxu0 0.0
  %48 = vmatpush1.msra.mxu0 %v20
  %49 = vmatprep.subr.mxu0 0.0
  %50 = vmatpush1.msra.mxu0 %v21
  %51 = vmatprep.subr.mxu0 0.0
  %52 = vmatpush1.msra.mxu0 %v22
  %53 = vmatprep.subr.mxu0 0.0
  %54 = vmatpush1.msra.mxu0 %v23
  %55 = vmatprep.subr.mxu0 0.0
  %56 = vmatpush1.msra.mxu0 %v24
  %57 = vmatprep.subr.mxu0 0.0
  %58 = vmatpush1.msra.mxu0 %v25
  %59 = vmatprep.subr.mxu0 0.0
  %60 = vmatpush1.msra.mxu0 %v26
  %61 = vmatprep.subr.mxu0 0.0
  %62 = vmatpush1.msra.mxu0 %v27
  %63 = vmatprep.subr.mxu0 0.0
  %64 = vmatpush1.msra.mxu0 %v28
  %65 = vmatprep.subr.mxu0 0.0
  %66 = vmatpush1.msra.mxu0 %v29
  %67 = vmatprep.subr.mxu0 0.0
  %68 = vmatpush1.msra.mxu0 %v30
  %69 = vmatprep.subr.mxu0 0.0
  %70 = vmatpush1.msra.mxu0 %v31
  %71 = vmatprep.subr.mxu0 0.0
  %72 = vmatpush1.msra.mxu0 0.0
  %73 = vmatprep.subr.mxu0 0.0
  %74 = vmatpush1.msra.mxu0 0.0
  %75 = vmatprep.subr.mxu0 0.0
  %76 = vmatpush1.msra.mxu0 0.0
  %77 = vmatprep.subr.mxu0 0.0
  %78 = vmatpush1.msra.mxu0 0.0
  %79 = vmatprep.subr.mxu0 0.0
  %80 = vmatpush1.msra.mxu0 0.0
  %81 = vmatprep.subr.mxu0 0.0
  %82 = vmatpush1.msra.mxu0 0.0
  %83 = vmatprep.subr.mxu0 0.0
  %84 = vmatpush1.msra.mxu0 0.0
  %85 = vmatprep.subr.mxu0 0.0
  %86 = vmatpush1.msra.mxu0 0.0
  %87 = vmatprep.subr.mxu0 0.0
  %88 = vmatpush1.msra.mxu0 0.0
  %89 = vmatprep.subr.mxu0 0.0
  %90 = vmatpush1.msra.mxu0 0.0
  %91 = vmatprep.subr.mxu0 0.0
  %92 = vmatpush1.msra.mxu0 0.0
  %93 = vmatprep.subr.mxu0 0.0
  %94 = vmatpush1.msra.mxu0 0.0
  %95 = vmatprep.subr.mxu0 0.0
  %96 = vmatpush1.msra.mxu0 0.0
  %97 = vmatprep.subr.mxu0 0.0
  %98 = vmatpush1.msra.mxu0 0.0
  %99 = vmatprep.subr.mxu0 0.0
  %100 = vmatpush1.msra.mxu0 0.0
  %101 = vmatprep.subr.mxu0 0.0
  %102 = vmatpush1.msra.mxu0 0.0
  %103 = vmatprep.mubr.f32.mxu0 0.0
  %104 = vmatmul.mubr.f32.gmra.mrb[0].mxu0 %v14
  %v105 = vpop.f32.mrb[0].mxu0
  %v106 = vadd.f32 %v37, %v105
  %v107 = vpop.f32.mrb[0].mxu0
  %108 = vmatprep.mubr.f32.mxu0 0.0
  %109 = vmatmul.mubr.f32.gmra.mrb[0].mxu0 %v15
  %v110 = vpop.f32.mrb[0].mxu0
  %v111 = vadd.f32 %v37, %v110
  %v112 = vpop.f32.mrb[0].mxu0
  %113 = vdwg.mxu0
  %v114 = vmax.f32 %v106, 0.0
  %v115 = vmax.f32 %v111, 0.0
  %116 = vst [vmem:[%s3] sm:$0xff] %v114
  %117 = vst [vmem:[%s3 + $0x8] sm:$0xff] %v115
  // Predicated region
  $region14: #{gnn_forward.8} parent=0 // pred_check
    _
  $region15: #{gnn_forward.8} parent=0 // pred_check_branch
    %119 = sbr.rel (0) target = $region17
  $region16: #{gnn_forward.8} parent=0 // pred_region
    _
  $region17: #{gnn_forward.8} parent=0 // pred_fallthru
    _
  // Predicated region
  $region18: #{gnn_forward.8} parent=0 // pred_check
    _
  $region19: #{gnn_forward.8} parent=0 // pred_check_branch
    %121 = sbr.rel (0) target = $region21
  $region20: #{gnn_forward.8} parent=0 // pred_region
    _
  $region21: #{gnn_forward.8} parent=0 // pred_fallthru
    _

// kernel: gnn_forward.11
$region0: #{gnn_forward.11}
  #allocation0 [shape = 'u32[]', space=smem, size = 0x4, offset = 0x4, fixed_abs, tag = 'smem constant byte address 0x4 - core index']
  #allocation1 [shape = 'u32[144,128]{1,0:T(1,128)}', space=vmem, size = 0x12000, scoped, tag = 'internal scratch']
  #allocation2 [shape = 'f32[16,128]{1,0:T(8,128)}', space=vmem, size = 0x2000, scoped, tag = 'scratch operand']
  %s0 = inlined_call_operand.vmem [shape: bf16[16,16], index: 0, kind: input, shape index: {}]
  %s1 = inlined_call_operand.vmem [shape: bf16[16,128], index: 1, kind: input, shape index: {}]
  %s2 = inlined_call_operand.vmem [shape: f32[1,128], index: 2, kind: input, shape index: {}]
  %s3 = inlined_call_operand.vmem [shape: f32[16,128], index: 3, kind: output, shape index: {}]
  %s4 = sld [smem:[#allocation0]]
  $region30: #{gnn_forward.11} parent=0
    _
  %s6 = ssub.s32 1, %s4
  %s7 = scalar_select 0, %s6, %s4
  // Predicated region
  $region2: #{gnn_forward.11} parent=0 // pred_check
    _
  $region3: #{gnn_forward.11} parent=0 // pred_check_branch
    %9 = sbr.rel (0) target = $region5
  $region4: #{gnn_forward.11} parent=0 // pred_region
    _
  $region5: #{gnn_forward.11} parent=0 // pred_fallthru
    _
  // Predicated region
  $region6: #{gnn_forward.11} parent=0 // pred_check
    _
  $region7: #{gnn_forward.11} parent=0 // pred_check_branch
    %11 = sbr.rel (0) target = $region9
  $region8: #{gnn_forward.11} parent=0 // pred_region
    _
  $region9: #{gnn_forward.11} parent=0 // pred_fallthru
    _
  // Predicated region
  $region10: #{gnn_forward.11} parent=0 // pred_check
    _
  $region11: #{gnn_forward.11} parent=0 // pred_check_branch
    %13 = sbr.rel (0) target = $region13
  $region12: #{gnn_forward.11} parent=0 // pred_region
    _
  $region13: #{gnn_forward.11} parent=0 // pred_fallthru
    _
  %p15 = scmp.eq.s32.totalorder 0, 0
  // Predicated region
  $region14: #{gnn_forward.11} parent=0 // pred_check
    %p16 = pneg %p15
  $region15: #{gnn_forward.11} parent=0 // pred_check_branch
    %18 = sbr.rel (%p16) target = $region17
  $region16: #{gnn_forward.11} parent=0 // pred_region
    %19 = vst [vmem:[#allocation2] sm:$0xff] 0.0
    %20 = vst [vmem:[#allocation2 + $0x8] sm:$0xff] 0.0
  $region17: #{gnn_forward.11} parent=0 // pred_fallthru
    _
  %v21 = vld [vmem:[#allocation2] sm:$0xff]
  %v22 = vld [vmem:[#allocation2 + $0x8] sm:$0xff]
  %v23 = vld [vmem:[%s0] sm:$0xf]
  %v24 = vld [vmem:[%s0 + $0x4] sm:$0xf]
  %v25 = vld [vmem:[%s1] sm:$0xf]
  %v26 = vld [vmem:[%s1 + $0x4] sm:$0xf]
  %v29 = vunpack.c.l.b16 %v23
  %v30 = vunpack.c.l.b16 %v24
  %v31 = vpack.c.b16 %v30, %v29
  %v34 = vunpack.c.l.b16 %v25
  %v35 = vunpack.c.l.b16 %v26
  %v36 = vpack.c.b16 %v35, %v34
  %vm38 = vcmask 130048
  %v40 = vsel %vm38, %v31, 0
  %42 = vmatprep.subr.bf16.mxu0 0
  %43 = vmatpush1.bf16.msra.mxu0 %v36
  %44 = vmatprep.subr.bf16.mxu0 0
  %45 = vmatpush1.bf16.msra.mxu0 0
  %46 = vmatprep.subr.bf16.mxu0 0
  %47 = vmatpush1.bf16.msra.mxu0 0
  %48 = vmatprep.subr.bf16.mxu0 0
  %49 = vmatpush1.bf16.msra.mxu0 0
  %50 = vmatprep.subr.bf16.mxu0 0
  %51 = vmatpush1.bf16.msra.mxu0 0
  %52 = vmatprep.subr.bf16.mxu0 0
  %53 = vmatpush1.bf16.msra.mxu0 0
  %54 = vmatprep.subr.bf16.mxu0 0
  %55 = vmatpush1.bf16.msra.mxu0 0
  %56 = vmatprep.subr.bf16.mxu0 0
  %57 = vmatpush1.bf16.msra.mxu0 0
  %58 = vmatprep.subr.bf16.mxu0 0
  %59 = vmatpush1.bf16.msra.mxu0 0
  %60 = vmatprep.subr.bf16.mxu0 0
  %61 = vmatpush1.bf16.msra.mxu0 0
  %62 = vmatprep.subr.bf16.mxu0 0
  %63 = vmatpush1.bf16.msra.mxu0 0
  %64 = vmatprep.subr.bf16.mxu0 0
  %65 = vmatpush1.bf16.msra.mxu0 0
  %66 = vmatprep.subr.bf16.mxu0 0
  %67 = vmatpush1.bf16.msra.mxu0 0
  %68 = vmatprep.subr.bf16.mxu0 0
  %69 = vmatpush1.bf16.msra.mxu0 0
  %70 = vmatprep.subr.bf16.mxu0 0
  %71 = vmatpush1.bf16.msra.mxu0 0
  %72 = vmatprep.subr.bf16.mxu0 0
  %73 = vmatpush1.bf16.msra.mxu0 0
  %74 = vmatprep.mubr.bf16.mxu0 0
  %75 = vmatmul.mubr.bf16.gmra.mrb[0].mxu0 %v40
  %v76 = vpop.f32.mrb[0].mxu0
  %v77 = vadd.f32 0.0, %v76
  %v78 = vpop.f32.mrb[0].mxu0
  %v79 = vpop.f32.mrb[0].mxu0
  %v80 = vadd.f32 0.0, %v79
  %v81 = vpop.f32.mrb[0].mxu0
  %82 = vdwg.mxu0
  %v83 = vadd.f32 %v21, %v77
  %v84 = vadd.f32 %v22, %v80
  %85 = vst [vmem:[#allocation2] sm:$0xff] %v83
  %86 = vst [vmem:[#allocation2 + $0x8] sm:$0xff] %v84
  // Predicated region
  $region18: #{gnn_forward.11} parent=0 // pred_check
    %p87 = pneg %p15
  $region19: #{gnn_forward.11} parent=0 // pred_check_branch
    %89 = sbr.rel (%p87) target = $region21
  $region20: #{gnn_forward.11} parent=0 // pred_region
    %v90 = vld [vmem:[#allocation2] sm:$0xff]
    %v91 = vld [vmem:[#allocation2 + $0x8] sm:$0xff]
    %v92 = vld [vmem:[%s2] sm:$0x1]
    %v94 = vlaneseq
    %v95 = vshrl.u32 %v94, 7
    %v96 = vsub.s32 0, %v95
    %v97 = vrot.slane %v92, %v96
    %v99 = vadd.f32 %v90, %v97
    %v100 = vadd.f32 %v91, %v97
    %101 = vst [vmem:[%s3] sm:$0xff] %v99
    %102 = vst [vmem:[%s3 + $0x8] sm:$0xff] %v100
  $region21: #{gnn_forward.11} parent=0 // pred_fallthru
    _
  // Predicated region
  $region22: #{gnn_forward.11} parent=0 // pred_check
    _
  $region23: #{gnn_forward.11} parent=0 // pred_check_branch
    %104 = sbr.rel (0) target = $region25
  $region24: #{gnn_forward.11} parent=0 // pred_region
    _
  $region25: #{gnn_forward.11} parent=0 // pred_fallthru
    _
  // Predicated region
  $region26: #{gnn_forward.11} parent=0 // pred_check
    _
  $region27: #{gnn_forward.11} parent=0 // pred_check_branch
    %106 = sbr.rel (0) target = $region29
  $region28: #{gnn_forward.11} parent=0 // pred_region
    _
  $region29: #{gnn_forward.11} parent=0 // pred_fallthru
    _

// kernel: gnn_forward.12
$region0: #{gnn_forward.12}
  #allocation0 [shape = 'u32[]', space=smem, size = 0x4, offset = 0x4, fixed_abs, tag = 'smem constant byte address 0x4 - core index']
  #allocation1 [shape = 'u32[144,128]{1,0:T(1,128)}', space=vmem, size = 0x12000, scoped, tag = 'internal scratch']
  %s0 = inlined_call_operand.vmem [shape: f32[16,128], index: 0, kind: input, shape index: {}]
  %s1 = inlined_call_operand.vmem [shape: f32[128,128], index: 1, kind: input, shape index: {}]
  %s2 = inlined_call_operand.vmem [shape: bf16[16,128], index: 2, kind: output, shape index: {}]
  %s3 = sld [smem:[#allocation0]]
  $region18: #{gnn_forward.12} parent=0
    _
  %s5 = ssub.s32 1, %s3
  %s6 = scalar_select 0, %s5, %s3
  // Predicated region
  $region2: #{gnn_forward.12} parent=0 // pred_check
    _
  $region3: #{gnn_forward.12} parent=0 // pred_check_branch
    %8 = sbr.rel (0) target = $region5
  $region4: #{gnn_forward.12} parent=0 // pred_region
    _
  $region5: #{gnn_forward.12} parent=0 // pred_fallthru
    _
  // Predicated region
  $region6: #{gnn_forward.12} parent=0 // pred_check
    _
  $region7: #{gnn_forward.12} parent=0 // pred_check_branch
    %10 = sbr.rel (0) target = $region9
  $region8: #{gnn_forward.12} parent=0 // pred_region
    _
  $region9: #{gnn_forward.12} parent=0 // pred_fallthru
    _
  %v12 = vld [vmem:[%s0] sm:$0xff]
  %v13 = vld [vmem:[%s0 + $0x8] sm:$0xff]
  %v14 = vpack.c.bf16 %v13, %v12
  %v15 = vld [vmem:[%s1] sm:$0xff]
  %v16 = vld [vmem:[%s1 + $0x8] sm:$0xff]
  %v17 = vld [vmem:[%s1 + $0x10] sm:$0xff]
  %v18 = vld [vmem:[%s1 + $0x18] sm:$0xff]
  %v19 = vld [vmem:[%s1 + $0x20] sm:$0xff]
  %v20 = vld [vmem:[%s1 + $0x28] sm:$0xff]
  %v21 = vld [vmem:[%s1 + $0x30] sm:$0xff]
  %v22 = vld [vmem:[%s1 + $0x38] sm:$0xff]
  %v23 = vld [vmem:[%s1 + $0x40] sm:$0xff]
  %v24 = vld [vmem:[%s1 + $0x48] sm:$0xff]
  %v25 = vld [vmem:[%s1 + $0x50] sm:$0xff]
  %v26 = vld [vmem:[%s1 + $0x58] sm:$0xff]
  %v27 = vld [vmem:[%s1 + $0x60] sm:$0xff]
  %v28 = vld [vmem:[%s1 + $0x68] sm:$0xff]
  %v29 = vld [vmem:[%s1 + $0x70] sm:$0xff]
  %v30 = vld [vmem:[%s1 + $0x78] sm:$0xff]
  %v31 = vpack.c.bf16 %v16, %v15
  %v32 = vpack.c.bf16 %v18, %v17
  %v33 = vpack.c.bf16 %v20, %v19
  %v34 = vpack.c.bf16 %v22, %v21
  %v35 = vpack.c.bf16 %v24, %v23
  %v36 = vpack.c.bf16 %v26, %v25
  %v37 = vpack.c.bf16 %v28, %v27
  %v38 = vpack.c.bf16 %v30, %v29
  %39 = vmatprep.subr.bf16.mxu0 0
  %40 = vmatpush1.bf16.msra.mxu0 %v31
  %41 = vmatprep.subr.bf16.mxu0 0
  %42 = vmatpush1.bf16.msra.mxu0 %v32
  %43 = vmatprep.subr.bf16.mxu0 0
  %44 = vmatpush1.bf16.msra.mxu0 %v33
  %45 = vmatprep.subr.bf16.mxu0 0
  %46 = vmatpush1.bf16.msra.mxu0 %v34
  %47 = vmatprep.subr.bf16.mxu0 0
  %48 = vmatpush1.bf16.msra.mxu0 %v35
  %49 = vmatprep.subr.bf16.mxu0 0
  %50 = vmatpush1.bf16.msra.mxu0 %v36
  %51 = vmatprep.subr.bf16.mxu0 0
  %52 = vmatpush1.bf16.msra.mxu0 %v37
  %53 = vmatprep.subr.bf16.mxu0 0
  %54 = vmatpush1.bf16.msra.mxu0 %v38
  %55 = vmatprep.subr.bf16.mxu0 0
  %56 = vmatpush1.bf16.msra.mxu0 0
  %57 = vmatprep.subr.bf16.mxu0 0
  %58 = vmatpush1.bf16.msra.mxu0 0
  %59 = vmatprep.subr.bf16.mxu0 0
  %60 = vmatpush1.bf16.msra.mxu0 0
  %61 = vmatprep.subr.bf16.mxu0 0
  %62 = vmatpush1.bf16.msra.mxu0 0
  %63 = vmatprep.subr.bf16.mxu0 0
  %64 = vmatpush1.bf16.msra.mxu0 0
  %65 = vmatprep.subr.bf16.mxu0 0
  %66 = vmatpush1.bf16.msra.mxu0 0
  %67 = vmatprep.subr.bf16.mxu0 0
  %68 = vmatpush1.bf16.msra.mxu0 0
  %69 = vmatprep.subr.bf16.mxu0 0
  %70 = vmatpush1.bf16.msra.mxu0 0
  %71 = vmatprep.mubr.bf16.mxu0 0
  %72 = vmatmul.mubr.bf16.gmra.mrb[0].mxu0 %v14
  %v73 = vpop.f32.mrb[0].mxu0
  %v74 = vadd.f32 0.0, %v73
  %v75 = vpop.f32.mrb[0].mxu0
  %v76 = vpop.f32.mrb[0].mxu0
  %v77 = vadd.f32 0.0, %v76
  %v78 = vpop.f32.mrb[0].mxu0
  %79 = vdwg.mxu0
  %v80 = vpack.c.bf16 %v77, %v74
  %v82 = vunpack.c.l.b16 %v80
  %v83 = vunpack.c.h.b16 %v80
  %v84 = vpack.c.b16 %v82, %v82
  %v85 = vpack.c.b16 %v83, %v83
  %88 = vst [vmem:[%s2] sm:$0xf] %v84
  %89 = vst [vmem:[%s2 + $0x4] sm:$0xf] %v85
  // Predicated region
  $region10: #{gnn_forward.12} parent=0 // pred_check
    _
  $region11: #{gnn_forward.12} parent=0 // pred_check_branch
    %91 = sbr.rel (0) target = $region13
  $region12: #{gnn_forward.12} parent=0 // pred_region
    _
  $region13: #{gnn_forward.12} parent=0 // pred_fallthru
    _
  // Predicated region
  $region14: #{gnn_forward.12} parent=0 // pred_check
    _
  $region15: #{gnn_forward.12} parent=0 // pred_check_branch
    %93 = sbr.rel (0) target = $region17
  $region16: #{gnn_forward.12} parent=0 // pred_region
    _
  $region17: #{gnn_forward.12} parent=0 // pred_fallthru
    _

// kernel: gnn_forward.15
$region0: #{gnn_forward.15}
  #allocation0 [shape = 'u32[]', space=smem, size = 0x4, offset = 0x4, fixed_abs, tag = 'smem constant byte address 0x4 - core index']
  #allocation1 [shape = 'u32[144,128]{1,0:T(1,128)}', space=vmem, size = 0x12000, scoped, tag = 'internal scratch']
  %s0 = inlined_call_operand.vmem [shape: f32[16,128], index: 0, kind: input, shape index: {}]
  %s1 = inlined_call_operand.vmem [shape: f32[1,128], index: 1, kind: input, shape index: {}]
  %s2 = inlined_call_operand.vmem [shape: f32[1,128], index: 2, kind: input, shape index: {}]
  %s3 = inlined_call_operand.vmem [shape: f32[1,128], index: 3, kind: input, shape index: {}]
  %s4 = inlined_call_operand.vmem [shape: f32[1,128], index: 4, kind: input, shape index: {}]
  %s5 = inlined_call_operand.vmem [shape: f32[128,128], index: 5, kind: input, shape index: {}]
  %s6 = inlined_call_operand.vmem [shape: f32[1,128], index: 6, kind: input, shape index: {}]
  %s7 = inlined_call_operand.vmem [shape: f32[16,128], index: 7, kind: output, shape index: {}]
  %s8 = sld [smem:[#allocation0]]
  $region38: #{gnn_forward.15} parent=0
    _
  %s10 = ssub.s32 1, %s8
  %s11 = scalar_select 0, %s10, %s8
  // Predicated region
  $region2: #{gnn_forward.15} parent=0 // pred_check
    _
  $region3: #{gnn_forward.15} parent=0 // pred_check_branch
    %13 = sbr.rel (0) target = $region5
  $region4: #{gnn_forward.15} parent=0 // pred_region
    _
  $region5: #{gnn_forward.15} parent=0 // pred_fallthru
    _
  // Predicated region
  $region6: #{gnn_forward.15} parent=0 // pred_check
    _
  $region7: #{gnn_forward.15} parent=0 // pred_check_branch
    %15 = sbr.rel (0) target = $region9
  $region8: #{gnn_forward.15} parent=0 // pred_region
    _
  $region9: #{gnn_forward.15} parent=0 // pred_fallthru
    _
  // Predicated region
  $region10: #{gnn_forward.15} parent=0 // pred_check
    _
  $region11: #{gnn_forward.15} parent=0 // pred_check_branch
    %17 = sbr.rel (0) target = $region13
  $region12: #{gnn_forward.15} parent=0 // pred_region
    _
  $region13: #{gnn_forward.15} parent=0 // pred_fallthru
    _
  // Predicated region
  $region14: #{gnn_forward.15} parent=0 // pred_check
    _
  $region15: #{gnn_forward.15} parent=0 // pred_check_branch
    %19 = sbr.rel (0) target = $region17
  $region16: #{gnn_forward.15} parent=0 // pred_region
    _
  $region17: #{gnn_forward.15} parent=0 // pred_fallthru
    _
  // Predicated region
  $region18: #{gnn_forward.15} parent=0 // pred_check
    _
  $region19: #{gnn_forward.15} parent=0 // pred_check_branch
    %21 = sbr.rel (0) target = $region21
  $region20: #{gnn_forward.15} parent=0 // pred_region
    _
  $region21: #{gnn_forward.15} parent=0 // pred_fallthru
    _
  // Predicated region
  $region22: #{gnn_forward.15} parent=0 // pred_check
    _
  $region23: #{gnn_forward.15} parent=0 // pred_check_branch
    %23 = sbr.rel (0) target = $region25
  $region24: #{gnn_forward.15} parent=0 // pred_region
    _
  $region25: #{gnn_forward.15} parent=0 // pred_fallthru
    _
  // Predicated region
  $region26: #{gnn_forward.15} parent=0 // pred_check
    _
  $region27: #{gnn_forward.15} parent=0 // pred_check_branch
    %25 = sbr.rel (0) target = $region29
  $region28: #{gnn_forward.15} parent=0 // pred_region
    _
  $region29: #{gnn_forward.15} parent=0 // pred_fallthru
    _
  %v26 = vld [vmem:[%s1] sm:$0x1]
  %v27 = vmul.f32 %v26, 0.0625
  %v28 = vld [vmem:[%s2] sm:$0x1]
  %v29 = vmul.f32 %v28, 0.0625
  %v30 = vmul.f32 %v27, %v27
  %v31 = vsub.f32 %v29, %v30
  %v32 = vmax.f32 %v31, 0.0
  %v33 = vld [vmem:[%s3] sm:$0x1]
  %v34 = vadd.f32 %v32, 1e-05
  %v35 = vrsqrt.pop %v34
  %v36 = vmul.f32 %v33, %v35
  %v37 = vld [vmem:[%s4] sm:$0x1]
  %v38 = vmul.f32 %v27, %v36
  %v39 = vsub.f32 %v37, %v38
  %v40 = vld [vmem:[%s0] sm:$0xff]
  %v41 = vld [vmem:[%s0 + $0x8] sm:$0xff]
  %v43 = vlaneseq
  %v44 = vshrl.u32 %v43, 7
  %v45 = vsub.s32 0, %v44
  %v46 = vrot.slane %v36, %v45
  %v48 = vmul.f32 %v40, %v46
  %v49 = vmul.f32 %v41, %v46
  %v51 = vlaneseq
  %v52 = vshrl.u32 %v51, 7
  %v53 = vsub.s32 0, %v52
  %v54 = vrot.slane %v39, %v53
  %v56 = vadd.f32 %v48, %v54
  %v57 = vadd.f32 %v49, %v54
  %v58 = vld [vmem:[%s5] sm:$0xff]
  %v59 = vld [vmem:[%s5 + $0x8] sm:$0xff]
  %v60 = vld [vmem:[%s5 + $0x10] sm:$0xff]
  %v61 = vld [vmem:[%s5 + $0x18] sm:$0xff]
  %v62 = vld [vmem:[%s5 + $0x20] sm:$0xff]
  %v63 = vld [vmem:[%s5 + $0x28] sm:$0xff]
  %v64 = vld [vmem:[%s5 + $0x30] sm:$0xff]
  %v65 = vld [vmem:[%s5 + $0x38] sm:$0xff]
  %v66 = vld [vmem:[%s5 + $0x40] sm:$0xff]
  %v67 = vld [vmem:[%s5 + $0x48] sm:$0xff]
  %v68 = vld [vmem:[%s5 + $0x50] sm:$0xff]
  %v69 = vld [vmem:[%s5 + $0x58] sm:$0xff]
  %v70 = vld [vmem:[%s5 + $0x60] sm:$0xff]
  %v71 = vld [vmem:[%s5 + $0x68] sm:$0xff]
  %v72 = vld [vmem:[%s5 + $0x70] sm:$0xff]
  %v73 = vld [vmem:[%s5 + $0x78] sm:$0xff]
  %v74 = vld [vmem:[%s6] sm:$0x1]
  %v76 = vlaneseq
  %v77 = vshrl.u32 %v76, 7
  %v78 = vsub.s32 0, %v77
  %v79 = vrot.slane %v74, %v78
  %81 = vmatprep.subr.mxu0 0.0
  %82 = vmatpush1.msra.mxu0 %v58
  %83 = vmatprep.subr.mxu0 0.0
  %84 = vmatpush1.msra.mxu0 %v59
  %85 = vmatprep.subr.mxu0 0.0
  %86 = vmatpush1.msra.mxu0 %v60
  %87 = vmatprep.subr.mxu0 0.0
  %88 = vmatpush1.msra.mxu0 %v61
  %89 = vmatprep.subr.mxu0 0.0
  %90 = vmatpush1.msra.mxu0 %v62
  %91 = vmatprep.subr.mxu0 0.0
  %92 = vmatpush1.msra.mxu0 %v63
  %93 = vmatprep.subr.mxu0 0.0
  %94 = vmatpush1.msra.mxu0 %v64
  %95 = vmatprep.subr.mxu0 0.0
  %96 = vmatpush1.msra.mxu0 %v65
  %97 = vmatprep.subr.mxu0 0.0
  %98 = vmatpush1.msra.mxu0 %v66
  %99 = vmatprep.subr.mxu0 0.0
  %100 = vmatpush1.msra.mxu0 %v67
  %101 = vmatprep.subr.mxu0 0.0
  %102 = vmatpush1.msra.mxu0 %v68
  %103 = vmatprep.subr.mxu0 0.0
  %104 = vmatpush1.msra.mxu0 %v69
  %105 = vmatprep.subr.mxu0 0.0
  %106 = vmatpush1.msra.mxu0 %v70
  %107 = vmatprep.subr.mxu0 0.0
  %108 = vmatpush1.msra.mxu0 %v71
  %109 = vmatprep.subr.mxu0 0.0
  %110 = vmatpush1.msra.mxu0 %v72
  %111 = vmatprep.subr.mxu0 0.0
  %112 = vmatpush1.msra.mxu0 %v73
  %113 = vmatprep.subr.mxu0 0.0
  %114 = vmatpush1.msra.mxu0 0.0
  %115 = vmatprep.subr.mxu0 0.0
  %116 = vmatpush1.msra.mxu0 0.0
  %117 = vmatprep.subr.mxu0 0.0
  %118 = vmatpush1.msra.mxu0 0.0
  %119 = vmatprep.subr.mxu0 0.0
  %120 = vmatpush1.msra.mxu0 0.0
  %121 = vmatprep.subr.mxu0 0.0
  %122 = vmatpush1.msra.mxu0 0.0
  %123 = vmatprep.subr.mxu0 0.0
  %124 = vmatpush1.msra.mxu0 0.0
  %125 = vmatprep.subr.mxu0 0.0
  %126 = vmatpush1.msra.mxu0 0.0
  %127 = vmatprep.subr.mxu0 0.0
  %128 = vmatpush1.msra.mxu0 0.0
  %129 = vmatprep.subr.mxu0 0.0
  %130 = vmatpush1.msra.mxu0 0.0
  %131 = vmatprep.subr.mxu0 0.0
  %132 = vmatpush1.msra.mxu0 0.0
  %133 = vmatprep.subr.mxu0 0.0
  %134 = vmatpush1.msra.mxu0 0.0
  %135 = vmatprep.subr.mxu0 0.0
  %136 = vmatpush1.msra.mxu0 0.0
  %137 = vmatprep.subr.mxu0 0.0
  %138 = vmatpush1.msra.mxu0 0.0
  %139 = vmatprep.subr.mxu0 0.0
  %140 = vmatpush1.msra.mxu0 0.0
  %141 = vmatprep.subr.mxu0 0.0
  %142 = vmatpush1.msra.mxu0 0.0
  %143 = vmatprep.subr.mxu0 0.0
  %144 = vmatpush1.msra.mxu0 0.0
  %145 = vmatprep.mubr.f32.mxu0 0.0
  %146 = vmatmul.mubr.f32.gmra.mrb[0].mxu0 %v56
  %v147 = vpop.f32.mrb[0].mxu0
  %v148 = vadd.f32 %v79, %v147
  %v149 = vpop.f32.mrb[0].mxu0
  %150 = vmatprep.mubr.f32.mxu0 0.0
  %151 = vmatmul.mubr.f32.gmra.mrb[0].mxu0 %v57
  %v152 = vpop.f32.mrb[0].mxu0
  %v153 = vadd.f32 %v79, %v152
  %v154 = vpop.f32.mrb[0].mxu0
  %155 = vdwg.mxu0
  %156 = vst [vmem:[%s7] sm:$0xff] %v148
  %157 = vst [vmem:[%s7 + $0x8] sm:$0xff] %v153
  // Predicated region
  $region30: #{gnn_forward.15} parent=0 // pred_check
    _
  $region31: #{gnn_forward.15} parent=0 // pred_check_branch
    %159 = sbr.rel (0) target = $region33
  $region32: #{gnn_forward.15} parent=0 // pred_region
    _
  $region33: #{gnn_forward.15} parent=0 // pred_fallthru
    _
  // Predicated region
  $region34: #{gnn_forward.15} parent=0 // pred_check
    _
  $region35: #{gnn_forward.15} parent=0 // pred_check_branch
    %161 = sbr.rel (0) target = $region37
  $region36: #{gnn_forward.15} parent=0 // pred_region
    _
  $region37: #{gnn_forward.15} parent=0 // pred_fallthru
    _

</llo_original>
